<compile_context>
chip_gen: v7x
topology: tpu7x:2x2x1
jax: 0.10.0
libtpu: 0.0.40
codegen_flags: <defaults>
</compile_context>

<pallas_src>
import functools

import jax
import jax.numpy as jnp
from jax.experimental import pallas as pl
from jax.experimental.pallas import tpu as pltpu

BN_EPS = 1e-5   # torch.nn.BatchNorm1d default eps
LANE = 128      # TPU lane width


def _round_up(v, m):
    return ((v + m - 1) // m) * m


# ------------------------------ Fused kernel -------------------------------- #

def fused_net_kernel(num_layers, hidden_pad,
                     a_ref, x_ref, w1_ref, w2_ref, gb_ref,
                     s_ref, pw1_ref, pw2_ref, pb_ref,
                     o_ref, m_ref):
    """Entire Net.forward; all intermediates live in VMEM.

    a_ref  : [N, N]            f32 adjacency with self-loops (A + I)
    x_ref  : [N, in_pad]       f32 padded node features
    w1_ref : [L, in_pad, Hp]   f32 stacked GIN first-linear weights
    w2_ref : [L, Hp, Hp]       f32 stacked GIN second-linear weights
    gb_ref : [2L, Hp]          f32 GIN biases (layer i: rows 2i, 2i+1)
    s_ref  : [B, N]            f32 one-hot pooling matrix
    pw1_ref: [L*Hp, Ep]        f32 proj_head linear 1
    pw2_ref: [Ep, Ep]          f32 proj_head linear 2
    pb_ref : [2, Ep]           f32 proj_head biases
    o_ref  : [B, Ep]           f32 output
    m_ref  : [N, L*Hp]         f32 VMEM slab (concat of per-layer embeddings)
    """
    a = a_ref[...]
    h = x_ref[...]
    in_pad = h.shape[1]
    n = h.shape[0]

    for i in range(num_layers):
        # GINConv (eps=0): (A + I) @ h  -- self-term folded into the adjacency.
        agg = jnp.dot(a, h, preferred_element_type=jnp.float32)
        # GIN MLP: Linear -> ReLU -> Linear
        z = jnp.dot(agg, w1_ref[i], preferred_element_type=jnp.float32) \
            + gb_ref[2 * i:2 * i + 1, :]
        z = jnp.maximum(z, 0.0)
        z = jnp.dot(z, w2_ref[i], preferred_element_type=jnp.float32) \
            + gb_ref[2 * i + 1:2 * i + 2, :]
        # encoder: x = F.relu(conv(x))
        z = jnp.maximum(z, 0.0)
        # BatchNorm1d (training-mode batch stats; gamma=1, beta=0 at init)
        mean = jnp.mean(z, axis=0, keepdims=True)
        var = jnp.mean((z - mean) ** 2, axis=0, keepdims=True)
        z = (z - mean) * jax.lax.rsqrt(var + BN_EPS)
        # "concatenate" by writing at a static column offset into the VMEM slab
        m_ref[:, i * hidden_pad:(i + 1) * hidden_pad] = z
        # next-layer input (re-pad to in_pad if feat_pad > hid_pad; usually a no-op)
        if in_pad > hidden_pad:
            h = jnp.concatenate(
                [z, jnp.zeros((n, in_pad - hidden_pad), z.dtype)], axis=1)
        else:
            h = z

    # global_add_pool over nodes per graph: pooled = S @ M
    pooled = jnp.dot(s_ref[...], m_ref[...], preferred_element_type=jnp.float32)
    # proj_head: Linear -> ReLU -> Linear
    p = jnp.dot(pooled, pw1_ref[...], preferred_element_type=jnp.float32) \
        + pb_ref[0:1, :]
    p = jnp.maximum(p, 0.0)
    o_ref[...] = jnp.dot(p, pw2_ref[...], preferred_element_type=jnp.float32) \
        + pb_ref[1:2, :]


def run_net_fused(a, x, w1_all, w2_all, gin_b, s, pw1, pw2, proj_b):
    """Single pallas_call: whole-array blocks in VMEM (tiny shapes), lane-dense output."""
    num_layers = w1_all.shape[0]
    n = x.shape[0]
    b = s.shape[0]
    hidden_pad = w1_all.shape[2]
    emb_pad = pw2.shape[1]

    kernel = functools.partial(fused_net_kernel, num_layers, hidden_pad)
    return pl.pallas_call(
        kernel,
        out_shape=jax.ShapeDtypeStruct((b, emb_pad), jnp.float32),
        scratch_shapes=[pltpu.VMEM((n, num_layers * hidden_pad), jnp.float32)],
    )(a, x, w1_all, w2_all, gin_b, s, pw1, pw2, proj_b)


# --------------------------- Parameter creation ----------------------------- #

def xavier_uniform(key, fan_in, fan_out):
    """nn.init.xavier_uniform_ on a torch Linear weight [out, in], stored as [in, out]."""
    limit = (6.0 / (fan_in + fan_out)) ** 0.5
    return jax.random.uniform(key, (fan_in, fan_out), jnp.float32, -limit, limit)


def init_net_params(key, num_features, hidden_dim, num_gc_layers):
    """Xavier-initialized real weights, zero-embedded into lane-dense (128) pads and
    packed into a handful of stacked arrays (few DMA descriptors per call)."""
    feat_pad = _round_up(max(num_features, 1), LANE)
    hid_pad = _round_up(hidden_dim, LANE)
    in_pad = max(feat_pad, hid_pad)
    emb = hidden_dim * num_gc_layers
    emb_pad = _round_up(emb, LANE)

    w1_all = jnp.zeros((num_gc_layers, in_pad, hid_pad), jnp.float32)
    w2_all = jnp.zeros((num_gc_layers, hid_pad, hid_pad), jnp.float32)
    for i in range(num_gc_layers):
        fin = num_features if i == 0 else hidden_dim
        key, k1, k2 = jax.random.split(key, 3)
        w1_all = w1_all.at[i, :fin, :hidden_dim].set(xavier_uniform(k1, fin, hidden_dim))
        w2_all = w2_all.at[i, :hidden_dim, :hidden_dim].set(
            xavier_uniform(k2, hidden_dim, hidden_dim))
    gin_b = jnp.zeros((2 * num_gc_layers, hid_pad), jnp.float32)   # torch init: bias = 0

    # proj_head weights, embedded into the padded concat layout:
    # real slab column of layer i, feature j sits at column i*hid_pad + j.
    key, k1, k2 = jax.random.split(key, 3)
    pw1_real = xavier_uniform(k1, emb, emb)
    pw1 = jnp.zeros((num_gc_layers * hid_pad, emb_pad), jnp.float32)
    for i in range(num_gc_layers):
        pw1 = pw1.at[i * hid_pad:i * hid_pad + hidden_dim, :emb].set(
            pw1_real[i * hidden_dim:(i + 1) * hidden_dim, :])
    pw2 = jnp.zeros((emb_pad, emb_pad), jnp.float32).at[:emb, :emb].set(
        xavier_uniform(k2, emb, emb))
    proj_b = jnp.zeros((2, emb_pad), jnp.float32)

    return {"w1": w1_all, "w2": w2_all, "gin_b": gin_b,
            "pw1": pw1, "pw2": pw2, "proj_b": proj_b}


# ------------------------------ Net.forward --------------------------------- #

@functools.partial(jax.jit, static_argnames=("num_graphs", "emb_dim"))
def net_forward(params, x, edge_index, batch, num_graphs, emb_dim):
    """Returns y = proj_head(encoder(x, edge_index, batch)) of shape [num_graphs, emb_dim]."""
    n = x.shape[0]
    in_pad = params["w1"].shape[1]

    # Glue: dense adjacency with self-loops fused into one scatter
    # (A[dst, src] = #edges src->dst, matching PyG GINConv message direction; +I for eps=0).
    src, dst = edge_index[0], edge_index[1]
    node_ids = jnp.arange(n, dtype=edge_index.dtype)
    idx_dst = jnp.concatenate([dst, node_ids])
    idx_src = jnp.concatenate([src, node_ids])
    a = jnp.zeros((n, n), jnp.float32).at[idx_dst, idx_src].add(1.0)

    # One-hot pooling matrix built directly as [B, N] (no transpose).
    s = (batch[None, :] == jnp.arange(num_graphs, dtype=batch.dtype)[:, None]
         ).astype(jnp.float32)

    # Pad features to the lane-dense width (padded columns are exactly zero).
    x_pad = jnp.zeros((n, in_pad), jnp.float32).at[:, :x.shape[1]].set(
        x.astype(jnp.float32))

    y_pad = run_net_fused(a, x_pad, params["w1"], params["w2"], params["gin_b"],
                          s, params["pw1"], params["pw2"], params["proj_b"])
    return y_pad[:, :emb_dim]


# --------------------------------- Main ------------------------------------- #

if __name__ == "__main__":
    num_features = 4
    hidden_dim = 32
    num_gc_layers = 3
    num_nodes = 16
    num_graphs = 2
    num_edges = 32
    emb_dim = hidden_dim * num_gc_layers

    key = jax.random.PRNGKey(0)
    key, kp, kx, ks, kd = jax.random.split(key, 5)

    params = init_net_params(kp, num_features, hidden_dim, num_gc_layers)

    # TODO(synk): the torch `x is None -> ones(N)` branch is handled by the caller
    # supplying a ones feature matrix; not modeled inside the kernel.
    x = jax.random.normal(kx, (num_nodes, num_features), jnp.float32)
    # random edges, kept within each graph's node range (8 nodes per graph)
    src_g = jax.random.randint(ks, (num_edges,), 0, num_nodes // num_graphs)
    dst_g = jax.random.randint(kd, (num_edges,), 0, num_nodes // num_graphs)
    graph_of_edge = jnp.arange(num_edges) % num_graphs
    offset = graph_of_edge * (num_nodes // num_graphs)
    edge_index = jnp.stack([src_g + offset, dst_g + offset]).astype(jnp.int32)   # [2, E]
    batch = jnp.repeat(jnp.arange(num_graphs, dtype=jnp.int32),
                       num_nodes // num_graphs)                                   # [N]

    y = net_forward(params, x, edge_index, batch, num_graphs, emb_dim)
    jax.block_until_ready(y)

    assert y.shape == (num_graphs, emb_dim)
    assert y.dtype == jnp.float32
    assert bool(jnp.all(jnp.isfinite(y)))
    print("KERNEL_OK")
</pallas_src>

<mosaic_0001>
module attributes {stable_mosaic.version = 11 : i64} {
  func.func private @main(%arg0: i32) attributes {dimension_semantics = [#tpu.dimension_semantics<core_parallel>], iteration_bounds = array<i64: 2>, tpu.core_type = #tpu.core_type<sc_scalar_subcore>, window_params = []} {
    return
  }
}

module attributes {stable_mosaic.version = 11 : i64} {
  func.func private @main(%arg0: i32) attributes {dimension_semantics = [#tpu.dimension_semantics<core_parallel>], iteration_bounds = array<i64: 2>, tpu.core_type = #tpu.core_type<sc_scalar_subcore>, window_params = []} {
    return
  }
}

module attributes {stable_mosaic.version = 11 : i64} {
  func.func @fused_net_kernel(%arg0: memref<16x16xf32, #tpu.memory_space<vmem>>, %arg1: memref<16x128xf32, #tpu.memory_space<vmem>>, %arg2: memref<3x128x128xf32, #tpu.memory_space<vmem>>, %arg3: memref<3x128x128xf32, #tpu.memory_space<vmem>>, %arg4: memref<6x128xf32, #tpu.memory_space<vmem>>, %arg5: memref<2x16xf32, #tpu.memory_space<vmem>>, %arg6: memref<384x128xf32, #tpu.memory_space<vmem>>, %arg7: memref<128x128xf32, #tpu.memory_space<vmem>>, %arg8: memref<2x128xf32, #tpu.memory_space<vmem>>, %arg9: memref<2x128xf32, #tpu.memory_space<vmem>>, %arg10: memref<16x384xf32, #tpu.memory_space<vmem>>) attributes {dimension_semantics = [], scalar_prefetch = 0 : i64, scratch_operands = 1 : i64, tpu.core_type = #tpu.core_type<tc>} {
    %c0 = arith.constant 0 : index
    %c0_0 = arith.constant 0 : index
    %0 = vector.load %arg0[%c0, %c0_0] : memref<16x16xf32, #tpu.memory_space<vmem>>, vector<16x16xf32>
    %c0_1 = arith.constant 0 : index
    %c0_2 = arith.constant 0 : index
    %1 = vector.load %arg1[%c0_1, %c0_2] : memref<16x128xf32, #tpu.memory_space<vmem>>, vector<16x128xf32>
    %cst = arith.constant dense<0.000000e+00> : vector<16x128xf32>
    %2 = tpu.matmul %0, %1, %cst {dimension_numbers = #tpu.dot_dimension_numbers<[1], [0], [0], [1], [0, 0, 1, 1], [], []>} : vector<16x16xf32>, vector<16x128xf32>, vector<16x128xf32> -> vector<16x128xf32>
    %c0_3 = arith.constant 0 : index
    %c0_4 = arith.constant 0 : index
    %c0_5 = arith.constant 0 : index
    %3 = vector.load %arg2[%c0_3, %c0_4, %c0_5] : memref<3x128x128xf32, #tpu.memory_space<vmem>>, vector<1x128x128xf32>
    %4 = vector.shape_cast %3 : vector<1x128x128xf32> to vector<128x128xf32>
    %cst_6 = arith.constant dense<0.000000e+00> : vector<16x128xf32>
    %5 = tpu.matmul %2, %4, %cst_6 {dimension_numbers = #tpu.dot_dimension_numbers<[1], [0], [0], [1], [0, 0, 1, 1], [], []>} : vector<16x128xf32>, vector<128x128xf32>, vector<16x128xf32> -> vector<16x128xf32>
    %c0_7 = arith.constant 0 : index
    %c0_8 = arith.constant 0 : index
    %6 = vector.load %arg4[%c0_7, %c0_8] : memref<6x128xf32, #tpu.memory_space<vmem>>, vector<1x128xf32>
    %7 = vector.broadcast %6 : vector<1x128xf32> to vector<16x128xf32>
    %8 = arith.addf %5, %7 : vector<16x128xf32>
    %cst_9 = arith.constant 0.000000e+00 : f32
    %9 = vector.broadcast %cst_9 : f32 to vector<16x128xf32>
    %10 = arith.maximumf %8, %9 : vector<16x128xf32>
    %c0_10 = arith.constant 0 : index
    %c0_11 = arith.constant 0 : index
    %c0_12 = arith.constant 0 : index
    %11 = vector.load %arg3[%c0_10, %c0_11, %c0_12] : memref<3x128x128xf32, #tpu.memory_space<vmem>>, vector<1x128x128xf32>
    %12 = vector.shape_cast %11 : vector<1x128x128xf32> to vector<128x128xf32>
    %cst_13 = arith.constant dense<0.000000e+00> : vector<16x128xf32>
    %13 = tpu.matmul %10, %12, %cst_13 {dimension_numbers = #tpu.dot_dimension_numbers<[1], [0], [0], [1], [0, 0, 1, 1], [], []>} : vector<16x128xf32>, vector<128x128xf32>, vector<16x128xf32> -> vector<16x128xf32>
    %c1 = arith.constant 1 : index
    %c0_14 = arith.constant 0 : index
    %14 = vector.load %arg4[%c1, %c0_14] : memref<6x128xf32, #tpu.memory_space<vmem>>, vector<1x128xf32>
    %15 = vector.broadcast %14 : vector<1x128xf32> to vector<16x128xf32>
    %16 = arith.addf %13, %15 : vector<16x128xf32>
    %cst_15 = arith.constant 0.000000e+00 : f32
    %17 = vector.broadcast %cst_15 : f32 to vector<16x128xf32>
    %18 = arith.maximumf %16, %17 : vector<16x128xf32>
    %cst_16 = arith.constant dense<0.000000e+00> : vector<128xf32>
    %19 = vector.multi_reduction <add>, %18, %cst_16 [0] : vector<16x128xf32> to vector<128xf32>
    %20 = vector.shape_cast %19 : vector<128xf32> to vector<1x128xf32>
    %cst_17 = arith.constant 1.600000e+01 : f32
    %21 = vector.broadcast %cst_17 : f32 to vector<1x128xf32>
    %22 = arith.divf %20, %21 : vector<1x128xf32>
    %23 = vector.broadcast %22 : vector<1x128xf32> to vector<16x128xf32>
    %24 = arith.subf %18, %23 : vector<16x128xf32>
    %25 = arith.mulf %24, %24 : vector<16x128xf32>
    %cst_18 = arith.constant dense<0.000000e+00> : vector<128xf32>
    %26 = vector.multi_reduction <add>, %25, %cst_18 [0] : vector<16x128xf32> to vector<128xf32>
    %27 = vector.shape_cast %26 : vector<128xf32> to vector<1x128xf32>
    %cst_19 = arith.constant 1.600000e+01 : f32
    %28 = vector.broadcast %cst_19 : f32 to vector<1x128xf32>
    %29 = arith.divf %27, %28 : vector<1x128xf32>
    %30 = vector.broadcast %22 : vector<1x128xf32> to vector<16x128xf32>
    %31 = arith.subf %18, %30 : vector<16x128xf32>
    %cst_20 = arith.constant 9.99999974E-6 : f32
    %32 = vector.broadcast %cst_20 : f32 to vector<1x128xf32>
    %33 = arith.addf %29, %32 : vector<1x128xf32>
    %34 = math.rsqrt %33 : vector<1x128xf32>
    %35 = vector.broadcast %34 : vector<1x128xf32> to vector<16x128xf32>
    %36 = arith.mulf %31, %35 : vector<16x128xf32>
    %c0_21 = arith.constant 0 : index
    %c0_22 = arith.constant 0 : index
    %37 = vector.load %arg10[%c0_21, %c0_22] : memref<16x384xf32, #tpu.memory_space<vmem>>, vector<16x128xf32>
    tpu.vector_store %arg10[%c0_21, %c0_22], %36 {strides = array<i32>} : memref<16x384xf32, #tpu.memory_space<vmem>>, vector<16x128xf32>,
    %cst_23 = arith.constant dense<0.000000e+00> : vector<16x128xf32>
    %38 = tpu.matmul %0, %36, %cst_23 {dimension_numbers = #tpu.dot_dimension_numbers<[1], [0], [0], [1], [0, 0, 1, 1], [], []>} : vector<16x16xf32>, vector<16x128xf32>, vector<16x128xf32> -> vector<16x128xf32>
    %c1_24 = arith.constant 1 : index
    %c0_25 = arith.constant 0 : index
    %c0_26 = arith.constant 0 : index
    %39 = vector.load %arg2[%c1_24, %c0_25, %c0_26] : memref<3x128x128xf32, #tpu.memory_space<vmem>>, vector<1x128x128xf32>
    %40 = vector.shape_cast %39 : vector<1x128x128xf32> to vector<128x128xf32>
    %cst_27 = arith.constant dense<0.000000e+00> : vector<16x128xf32>
    %41 = tpu.matmul %38, %40, %cst_27 {dimension_numbers = #tpu.dot_dimension_numbers<[1], [0], [0], [1], [0, 0, 1, 1], [], []>} : vector<16x128xf32>, vector<128x128xf32>, vector<16x128xf32> -> vector<16x128xf32>
    %c2 = arith.constant 2 : index
    %c0_28 = arith.constant 0 : index
    %42 = vector.load %arg4[%c2, %c0_28] : memref<6x128xf32, #tpu.memory_space<vmem>>, vector<1x128xf32>
    %43 = vector.broadcast %42 : vector<1x128xf32> to vector<16x128xf32>
    %44 = arith.addf %41, %43 : vector<16x128xf32>
    %cst_29 = arith.constant 0.000000e+00 : f32
    %45 = vector.broadcast %cst_29 : f32 to vector<16x128xf32>
    %46 = arith.maximumf %44, %45 : vector<16x128xf32>
    %c1_30 = arith.constant 1 : index
    %c0_31 = arith.constant 0 : index
    %c0_32 = arith.constant 0 : index
    %47 = vector.load %arg3[%c1_30, %c0_31, %c0_32] : memref<3x128x128xf32, #tpu.memory_space<vmem>>, vector<1x128x128xf32>
    %48 = vector.shape_cast %47 : vector<1x128x128xf32> to vector<128x128xf32>
    %cst_33 = arith.constant dense<0.000000e+00> : vector<16x128xf32>
    %49 = tpu.matmul %46, %48, %cst_33 {dimension_numbers = #tpu.dot_dimension_numbers<[1], [0], [0], [1], [0, 0, 1, 1], [], []>} : vector<16x128xf32>, vector<128x128xf32>, vector<16x128xf32> -> vector<16x128xf32>
    %c3 = arith.constant 3 : index
    %c0_34 = arith.constant 0 : index
    %50 = vector.load %arg4[%c3, %c0_34] : memref<6x128xf32, #tpu.memory_space<vmem>>, vector<1x128xf32>
    %51 = vector.broadcast %50 : vector<1x128xf32> to vector<16x128xf32>
    %52 = arith.addf %49, %51 : vector<16x128xf32>
    %cst_35 = arith.constant 0.000000e+00 : f32
    %53 = vector.broadcast %cst_35 : f32 to vector<16x128xf32>
    %54 = arith.maximumf %52, %53 : vector<16x128xf32>
    %cst_36 = arith.constant dense<0.000000e+00> : vector<128xf32>
    %55 = vector.multi_reduction <add>, %54, %cst_36 [0] : vector<16x128xf32> to vector<128xf32>
    %56 = vector.shape_cast %55 : vector<128xf32> to vector<1x128xf32>
    %cst_37 = arith.constant 1.600000e+01 : f32
    %57 = vector.broadcast %cst_37 : f32 to vector<1x128xf32>
    %58 = arith.divf %56, %57 : vector<1x128xf32>
    %59 = vector.broadcast %58 : vector<1x128xf32> to vector<16x128xf32>
    %60 = arith.subf %54, %59 : vector<16x128xf32>
    %61 = arith.mulf %60, %60 : vector<16x128xf32>
    %cst_38 = arith.constant dense<0.000000e+00> : vector<128xf32>
    %62 = vector.multi_reduction <add>, %61, %cst_38 [0] : vector<16x128xf32> to vector<128xf32>
    %63 = vector.shape_cast %62 : vector<128xf32> to vector<1x128xf32>
    %cst_39 = arith.constant 1.600000e+01 : f32
    %64 = vector.broadcast %cst_39 : f32 to vector<1x128xf32>
    %65 = arith.divf %63, %64 : vector<1x128xf32>
    %66 = vector.broadcast %58 : vector<1x128xf32> to vector<16x128xf32>
    %67 = arith.subf %54, %66 : vector<16x128xf32>
    %cst_40 = arith.constant 9.99999974E-6 : f32
    %68 = vector.broadcast %cst_40 : f32 to vector<1x128xf32>
    %69 = arith.addf %65, %68 : vector<1x128xf32>
    %70 = math.rsqrt %69 : vector<1x128xf32>
    %71 = vector.broadcast %70 : vector<1x128xf32> to vector<16x128xf32>
    %72 = arith.mulf %67, %71 : vector<16x128xf32>
    %c0_41 = arith.constant 0 : index
    %c128 = arith.constant 128 : index
    %73 = vector.load %arg10[%c0_41, %c128] : memref<16x384xf32, #tpu.memory_space<vmem>>, vector<16x128xf32>
    tpu.vector_store %arg10[%c0_41, %c128], %72 {strides = array<i32>} : memref<16x384xf32, #tpu.memory_space<vmem>>, vector<16x128xf32>,
    %cst_42 = arith.constant dense<0.000000e+00> : vector<16x128xf32>
    %74 = tpu.matmul %0, %72, %cst_42 {dimension_numbers = #tpu.dot_dimension_numbers<[1], [0], [0], [1], [0, 0, 1, 1], [], []>} : vector<16x16xf32>, vector<16x128xf32>, vector<16x128xf32> -> vector<16x128xf32>
    %c2_43 = arith.constant 2 : index
    %c0_44 = arith.constant 0 : index
    %c0_45 = arith.constant 0 : index
    %75 = vector.load %arg2[%c2_43, %c0_44, %c0_45] : memref<3x128x128xf32, #tpu.memory_space<vmem>>, vector<1x128x128xf32>
    %76 = vector.shape_cast %75 : vector<1x128x128xf32> to vector<128x128xf32>
    %cst_46 = arith.constant dense<0.000000e+00> : vector<16x128xf32>
    %77 = tpu.matmul %74, %76, %cst_46 {dimension_numbers = #tpu.dot_dimension_numbers<[1], [0], [0], [1], [0, 0, 1, 1], [], []>} : vector<16x128xf32>, vector<128x128xf32>, vector<16x128xf32> -> vector<16x128xf32>
    %c4 = arith.constant 4 : index
    %c0_47 = arith.constant 0 : index
    %78 = vector.load %arg4[%c4, %c0_47] : memref<6x128xf32, #tpu.memory_space<vmem>>, vector<1x128xf32>
    %79 = vector.broadcast %78 : vector<1x128xf32> to vector<16x128xf32>
    %80 = arith.addf %77, %79 : vector<16x128xf32>
    %cst_48 = arith.constant 0.000000e+00 : f32
    %81 = vector.broadcast %cst_48 : f32 to vector<16x128xf32>
    %82 = arith.maximumf %80, %81 : vector<16x128xf32>
    %c2_49 = arith.constant 2 : index
    %c0_50 = arith.constant 0 : index
    %c0_51 = arith.constant 0 : index
    %83 = vector.load %arg3[%c2_49, %c0_50, %c0_51] : memref<3x128x128xf32, #tpu.memory_space<vmem>>, vector<1x128x128xf32>
    %84 = vector.shape_cast %83 : vector<1x128x128xf32> to vector<128x128xf32>
    %cst_52 = arith.constant dense<0.000000e+00> : vector<16x128xf32>
    %85 = tpu.matmul %82, %84, %cst_52 {dimension_numbers = #tpu.dot_dimension_numbers<[1], [0], [0], [1], [0, 0, 1, 1], [], []>} : vector<16x128xf32>, vector<128x128xf32>, vector<16x128xf32> -> vector<16x128xf32>
    %c5 = arith.constant 5 : index
    %c0_53 = arith.constant 0 : index
    %86 = vector.load %arg4[%c5, %c0_53] : memref<6x128xf32, #tpu.memory_space<vmem>>, vector<1x128xf32>
    %87 = vector.broadcast %86 : vector<1x128xf32> to vector<16x128xf32>
    %88 = arith.addf %85, %87 : vector<16x128xf32>
    %cst_54 = arith.constant 0.000000e+00 : f32
    %89 = vector.broadcast %cst_54 : f32 to vector<16x128xf32>
    %90 = arith.maximumf %88, %89 : vector<16x128xf32>
    %cst_55 = arith.constant dense<0.000000e+00> : vector<128xf32>
    %91 = vector.multi_reduction <add>, %90, %cst_55 [0] : vector<16x128xf32> to vector<128xf32>
    %92 = vector.shape_cast %91 : vector<128xf32> to vector<1x128xf32>
    %cst_56 = arith.constant 1.600000e+01 : f32
    %93 = vector.broadcast %cst_56 : f32 to vector<1x128xf32>
    %94 = arith.divf %92, %93 : vector<1x128xf32>
    %95 = vector.broadcast %94 : vector<1x128xf32> to vector<16x128xf32>
    %96 = arith.subf %90, %95 : vector<16x128xf32>
    %97 = arith.mulf %96, %96 : vector<16x128xf32>
    %cst_57 = arith.constant dense<0.000000e+00> : vector<128xf32>
    %98 = vector.multi_reduction <add>, %97, %cst_57 [0] : vector<16x128xf32> to vector<128xf32>
    %99 = vector.shape_cast %98 : vector<128xf32> to vector<1x128xf32>
    %cst_58 = arith.constant 1.600000e+01 : f32
    %100 = vector.broadcast %cst_58 : f32 to vector<1x128xf32>
    %101 = arith.divf %99, %100 : vector<1x128xf32>
    %102 = vector.broadcast %94 : vector<1x128xf32> to vector<16x128xf32>
    %103 = arith.subf %90, %102 : vector<16x128xf32>
    %cst_59 = arith.constant 9.99999974E-6 : f32
    %104 = vector.broadcast %cst_59 : f32 to vector<1x128xf32>
    %105 = arith.addf %101, %104 : vector<1x128xf32>
    %106 = math.rsqrt %105 : vector<1x128xf32>
    %107 = vector.broadcast %106 : vector<1x128xf32> to vector<16x128xf32>
    %108 = arith.mulf %103, %107 : vector<16x128xf32>
    %c0_60 = arith.constant 0 : index
    %c256 = arith.constant 256 : index
    %109 = vector.load %arg10[%c0_60, %c256] : memref<16x384xf32, #tpu.memory_space<vmem>>, vector<16x128xf32>
    tpu.vector_store %arg10[%c0_60, %c256], %108 {strides = array<i32>} : memref<16x384xf32, #tpu.memory_space<vmem>>, vector<16x128xf32>,
    %c0_61 = arith.constant 0 : index
    %c0_62 = arith.constant 0 : index
    %110 = vector.load %arg5[%c0_61, %c0_62] : memref<2x16xf32, #tpu.memory_space<vmem>>, vector<2x16xf32>
    %c0_63 = arith.constant 0 : index
    %c0_64 = arith.constant 0 : index
    %111 = vector.load %arg10[%c0_63, %c0_64] : memref<16x384xf32, #tpu.memory_space<vmem>>, vector<16x384xf32>
    %cst_65 = arith.constant dense<0.000000e+00> : vector<2x384xf32>
    %112 = tpu.matmul %110, %111, %cst_65 {dimension_numbers = #tpu.dot_dimension_numbers<[1], [0], [0], [1], [0, 0, 1, 1], [], []>} : vector<2x16xf32>, vector<16x384xf32>, vector<2x384xf32> -> vector<2x384xf32>
    %c0_66 = arith.constant 0 : index
    %c0_67 = arith.constant 0 : index
    %113 = vector.load %arg6[%c0_66, %c0_67] : memref<384x128xf32, #tpu.memory_space<vmem>>, vector<384x128xf32>
    %cst_68 = arith.constant dense<0.000000e+00> : vector<2x128xf32>
    %114 = tpu.matmul %112, %113, %cst_68 {dimension_numbers = #tpu.dot_dimension_numbers<[1], [0], [0], [1], [0, 0, 1, 1], [], []>} : vector<2x384xf32>, vector<384x128xf32>, vector<2x128xf32> -> vector<2x128xf32>
    %c0_69 = arith.constant 0 : index
    %c0_70 = arith.constant 0 : index
    %115 = vector.load %arg8[%c0_69, %c0_70] : memref<2x128xf32, #tpu.memory_space<vmem>>, vector<1x128xf32>
    %116 = vector.broadcast %115 : vector<1x128xf32> to vector<2x128xf32>
    %117 = arith.addf %114, %116 : vector<2x128xf32>
    %cst_71 = arith.constant 0.000000e+00 : f32
    %118 = vector.broadcast %cst_71 : f32 to vector<2x128xf32>
    %119 = arith.maximumf %117, %118 : vector<2x128xf32>
    %c0_72 = arith.constant 0 : index
    %c0_73 = arith.constant 0 : index
    %120 = vector.load %arg7[%c0_72, %c0_73] : memref<128x128xf32, #tpu.memory_space<vmem>>, vector<128x128xf32>
    %cst_74 = arith.constant dense<0.000000e+00> : vector<2x128xf32>
    %121 = tpu.matmul %119, %120, %cst_74 {dimension_numbers = #tpu.dot_dimension_numbers<[1], [0], [0], [1], [0, 0, 1, 1], [], []>} : vector<2x128xf32>, vector<128x128xf32>, vector<2x128xf32> -> vector<2x128xf32>
    %c1_75 = arith.constant 1 : index
    %c0_76 = arith.constant 0 : index
    %122 = vector.load %arg8[%c1_75, %c0_76] : memref<2x128xf32, #tpu.memory_space<vmem>>, vector<1x128xf32>
    %123 = vector.broadcast %122 : vector<1x128xf32> to vector<2x128xf32>
    %124 = arith.addf %121, %123 : vector<2x128xf32>
    %c0_77 = arith.constant 0 : index
    %c0_78 = arith.constant 0 : index
    %125 = vector.load %arg9[%c0_77, %c0_78] : memref<2x128xf32, #tpu.memory_space<vmem>>, vector<2x128xf32>
    tpu.vector_store %arg9[%c0_77, %c0_78], %124 {strides = array<i32>} : memref<2x128xf32, #tpu.memory_space<vmem>>, vector<2x128xf32>,
    return
  }
}

</mosaic_0001>

<llo_original>
// kernel: net_forward.1
$region0: #{net_forward.1}
  #allocation0 [shape = 'u32[]', space=smem, size = 0x4, offset = 0x4, fixed_abs, tag = 'smem constant byte address 0x4 - core index']
  #allocation1 [shape = 'u32[144,128]{1,0:T(1,128)}', space=vmem, size = 0x12000, scoped, tag = 'internal scratch']
  #allocation2 [shape = 'f32[16,384]{1,0:T(8,128)}', space=vmem, size = 0x6000, scoped, tag = 'scratch operand']
  %s0 = inlined_call_operand.hbm [shape: f32[16,16], index: 0, kind: input, shape index: {}]
  %s1 = inlined_call_operand.vmem [shape: f32[16,128], index: 1, kind: input, shape index: {}]
  %s2 = inlined_call_operand.vmem [shape: f32[3,128,128], index: 2, kind: input, shape index: {}]
  %s3 = inlined_call_operand.vmem [shape: f32[3,128,128], index: 3, kind: input, shape index: {}]
  %s4 = inlined_call_operand.vmem [shape: f32[6,128], index: 4, kind: input, shape index: {}]
  %s5 = inlined_call_operand.vmem [shape: f32[2,16], index: 5, kind: input, shape index: {}]
  %s6 = inlined_call_operand.vmem [shape: f32[384,128], index: 6, kind: input, shape index: {}]
  %s7 = inlined_call_operand.vmem [shape: f32[128,128], index: 7, kind: input, shape index: {}]
  %s8 = inlined_call_operand.vmem [shape: f32[2,128], index: 8, kind: input, shape index: {}]
  %s9 = inlined_call_operand.hbm [shape: f32[2,128], index: 9, kind: output, shape index: {}]
  %s10 = sld [smem:[#allocation0]]
  $region50: #{net_forward.1} parent=0
    _
  %s12 = ssub.s32 1, %s10
  %s13 = scalar_select 0, %s12, %s10
  $region1: #{net_forward.1} parent=0
    #allocation3 [shape = 'u8[8192]{0}', space=vmem, size = 0x2000, scoped, tag = 'input window, operand 0, single buffered']
    #allocation4 [shape = 's32[1]{0}', space=sflag, size = 0x4, scoped, tag = 'scoped memory for net_forward.1']
    #allocation5 [shape = 's32[1]{0}', space=sflag, size = 0x4, scoped, tag = 'scoped memory for net_forward.1']
    #allocation6 [shape = 'u8[1024]{0}', space=vmem, size = 0x400, scoped, tag = 'output window, operand 0, single buffered']
    %14 = vsyncpa [#allocation4], 0
    %15 = vsyncpa [#allocation5], 0
    // Predicated region
    $region2: #{net_forward.1} parent=1 // pred_check
      _
    $region3: #{net_forward.1} parent=1 // pred_check_branch
      %17 = sbr.rel (0) target = $region5
    $region4: #{net_forward.1} parent=1 // pred_region
      %s19 = ssub.s32 256, 256
      %20 = vsyncadd [#allocation4], %s19
      %s21 = sshll.u32 [#allocation3], 4
      %s22 = int_to_ptr.vmem [resolvable:$true] %s21
      %27 = dma.hbm_to_vmem [thread:$0]  %s0, 256, %s22, [#allocation4], 128, 128, 8
    $region5: #{net_forward.1} parent=1 // pred_fallthru
      _
    // Predicated region
    $region6: #{net_forward.1} parent=1 // pred_check
      _
    $region7: #{net_forward.1} parent=1 // pred_check_branch
      %29 = sbr.rel (0) target = $region9
    $region8: #{net_forward.1} parent=1 // pred_region
      _
    $region9: #{net_forward.1} parent=1 // pred_fallthru
      _
    // Predicated region
    $region10: #{net_forward.1} parent=1 // pred_check
      _
    $region11: #{net_forward.1} parent=1 // pred_check_branch
      %31 = sbr.rel (0) target = $region13
    $region12: #{net_forward.1} parent=1 // pred_region
      _
    $region13: #{net_forward.1} parent=1 // pred_fallthru
      _
    // Predicated region
    $region14: #{net_forward.1} parent=1 // pred_check
      _
    $region15: #{net_forward.1} parent=1 // pred_check_branch
      %33 = sbr.rel (0) target = $region17
    $region16: #{net_forward.1} parent=1 // pred_region
      _
    $region17: #{net_forward.1} parent=1 // pred_fallthru
      _
    // Predicated region
    $region18: #{net_forward.1} parent=1 // pred_check
      _
    $region19: #{net_forward.1} parent=1 // pred_check_branch
      %35 = sbr.rel (0) target = $region21
    $region20: #{net_forward.1} parent=1 // pred_region
      _
    $region21: #{net_forward.1} parent=1 // pred_fallthru
      _
    // Predicated region
    $region22: #{net_forward.1} parent=1 // pred_check
      _
    $region23: #{net_forward.1} parent=1 // pred_check_branch
      %37 = sbr.rel (0) target = $region25
    $region24: #{net_forward.1} parent=1 // pred_region
      _
    $region25: #{net_forward.1} parent=1 // pred_fallthru
      _
    // Predicated region
    $region26: #{net_forward.1} parent=1 // pred_check
      _
    $region27: #{net_forward.1} parent=1 // pred_check_branch
      %39 = sbr.rel (0) target = $region29
    $region28: #{net_forward.1} parent=1 // pred_region
      _
    $region29: #{net_forward.1} parent=1 // pred_fallthru
      _
    // Predicated region
    $region30: #{net_forward.1} parent=1 // pred_check
      _
    $region31: #{net_forward.1} parent=1 // pred_check_branch
      %41 = sbr.rel (0) target = $region33
    $region32: #{net_forward.1} parent=1 // pred_region
      _
    $region33: #{net_forward.1} parent=1 // pred_fallthru
      _
    // Predicated region
    $region34: #{net_forward.1} parent=1 // pred_check
      _
    $region35: #{net_forward.1} parent=1 // pred_check_branch
      %43 = sbr.rel (0) target = $region37
    $region36: #{net_forward.1} parent=1 // pred_region
      _
    $region37: #{net_forward.1} parent=1 // pred_fallthru
      _
    // Predicated region
    $region38: #{net_forward.1} parent=1 // pred_check
      _
    $region39: #{net_forward.1} parent=1 // pred_check_branch
      %45 = sbr.rel (0) target = $region41
    $region40: #{net_forward.1} parent=1 // pred_region
      %46 = dma.done [#allocation4], 256
    $region41: #{net_forward.1} parent=1 // pred_fallthru
      _
    %v47 = vld [vmem:[#allocation3] sm:$0xff]
    %v48 = vld [vmem:[#allocation3 + $0x8] sm:$0xff]
    %v49 = vld [vmem:[%s1] sm:$0xff]
    %v50 = vld [vmem:[%s1 + $0x8] sm:$0xff]
    %vm51 = vcmask 130048
    %v53 = vsel %vm51, %v47, 0
    %v56 = vsel %vm51, %v48, 0
    %58 = vmatprep.subr.mxu0 0.0
    %59 = vmatpush1.msra.mxu0 %v49
    %60 = vmatprep.subr.mxu0 0.0
    %61 = vmatpush1.msra.mxu0 %v50
    %62 = vmatprep.subr.mxu0 0.0
    %63 = vmatpush1.msra.mxu0 0.0
    %64 = vmatprep.subr.mxu0 0.0
    %65 = vmatpush1.msra.mxu0 0.0
    %66 = vmatprep.subr.mxu0 0.0
    %67 = vmatpush1.msra.mxu0 0.0
    %68 = vmatprep.subr.mxu0 0.0
    %69 = vmatpush1.msra.mxu0 0.0
    %70 = vmatprep.subr.mxu0 0.0
    %71 = vmatpush1.msra.mxu0 0.0
    %72 = vmatprep.subr.mxu0 0.0
    %73 = vmatpush1.msra.mxu0 0.0
    %74 = vmatprep.subr.mxu0 0.0
    %75 = vmatpush1.msra.mxu0 0.0
    %76 = vmatprep.subr.mxu0 0.0
    %77 = vmatpush1.msra.mxu0 0.0
    %78 = vmatprep.subr.mxu0 0.0
    %79 = vmatpush1.msra.mxu0 0.0
    %80 = vmatprep.subr.mxu0 0.0
    %81 = vmatpush1.msra.mxu0 0.0
    %82 = vmatprep.subr.mxu0 0.0
    %83 = vmatpush1.msra.mxu0 0.0
    %84 = vmatprep.subr.mxu0 0.0
    %85 = vmatpush1.msra.mxu0 0.0
    %86 = vmatprep.subr.mxu0 0.0
    %87 = vmatpush1.msra.mxu0 0.0
    %88 = vmatprep.subr.mxu0 0.0
    %89 = vmatpush1.msra.mxu0 0.0
    %90 = vmatprep.subr.mxu0 0.0
    %91 = vmatpush1.msra.mxu0 0.0
    %92 = vmatprep.subr.mxu0 0.0
    %93 = vmatpush1.msra.mxu0 0.0
    %94 = vmatprep.subr.mxu0 0.0
    %95 = vmatpush1.msra.mxu0 0.0
    %96 = vmatprep.subr.mxu0 0.0
    %97 = vmatpush1.msra.mxu0 0.0
    %98 = vmatprep.subr.mxu0 0.0
    %99 = vmatpush1.msra.mxu0 0.0
    %100 = vmatprep.subr.mxu0 0.0
    %101 = vmatpush1.msra.mxu0 0.0
    %102 = vmatprep.subr.mxu0 0.0
    %103 = vmatpush1.msra.mxu0 0.0
    %104 = vmatprep.subr.mxu0 0.0
    %105 = vmatpush1.msra.mxu0 0.0
    %106 = vmatprep.subr.mxu0 0.0
    %107 = vmatpush1.msra.mxu0 0.0
    %108 = vmatprep.subr.mxu0 0.0
    %109 = vmatpush1.msra.mxu0 0.0
    %110 = vmatprep.subr.mxu0 0.0
    %111 = vmatpush1.msra.mxu0 0.0
    %112 = vmatprep.subr.mxu0 0.0
    %113 = vmatpush1.msra.mxu0 0.0
    %114 = vmatprep.subr.mxu0 0.0
    %115 = vmatpush1.msra.mxu0 0.0
    %116 = vmatprep.subr.mxu0 0.0
    %117 = vmatpush1.msra.mxu0 0.0
    %118 = vmatprep.subr.mxu0 0.0
    %119 = vmatpush1.msra.mxu0 0.0
    %120 = vmatprep.subr.mxu0 0.0
    %121 = vmatpush1.msra.mxu0 0.0
    %122 = vmatprep.mubr.f32.mxu0 0.0
    %123 = vmatmul.mubr.f32.gmra.mrb[0].mxu0 %v53
    %v124 = vpop.f32.mrb[0].mxu0
    %v125 = vadd.f32 0.0, %v124
    %v126 = vpop.f32.mrb[0].mxu0
    %127 = vmatprep.mubr.f32.mxu0 0.0
    %128 = vmatmul.mubr.f32.gmra.mrb[0].mxu0 %v56
    %v129 = vpop.f32.mrb[0].mxu0
    %v130 = vadd.f32 0.0, %v129
    %v131 = vpop.f32.mrb[0].mxu0
    %132 = vdwg.mxu0
    %v133 = vld [vmem:[%s2] sm:$0xff]
    %v134 = vld [vmem:[%s2 + $0x8] sm:$0xff]
    %v135 = vld [vmem:[%s2 + $0x10] sm:$0xff]
    %v136 = vld [vmem:[%s2 + $0x18] sm:$0xff]
    %v137 = vld [vmem:[%s2 + $0x20] sm:$0xff]
    %v138 = vld [vmem:[%s2 + $0x28] sm:$0xff]
    %v139 = vld [vmem:[%s2 + $0x30] sm:$0xff]
    %v140 = vld [vmem:[%s2 + $0x38] sm:$0xff]
    %v141 = vld [vmem:[%s2 + $0x40] sm:$0xff]
    %v142 = vld [vmem:[%s2 + $0x48] sm:$0xff]
    %v143 = vld [vmem:[%s2 + $0x50] sm:$0xff]
    %v144 = vld [vmem:[%s2 + $0x58] sm:$0xff]
    %v145 = vld [vmem:[%s2 + $0x60] sm:$0xff]
    %v146 = vld [vmem:[%s2 + $0x68] sm:$0xff]
    %v147 = vld [vmem:[%s2 + $0x70] sm:$0xff]
    %v148 = vld [vmem:[%s2 + $0x78] sm:$0xff]
    %v149 = vld [vmem:[%s4] sm:$0x1]
    %v150 = vlaneseq
    %v151 = vshrl.u32 %v150, 7
    %v152 = vsub.s32 0, %v151
    %v153 = vrot.slane %v149, %v152
    %154 = vmatprep.subr.mxu0 0.0
    %155 = vmatpush1.msra.mxu0 %v133
    %156 = vmatprep.subr.mxu0 0.0
    %157 = vmatpush1.msra.mxu0 %v134
    %158 = vmatprep.subr.mxu0 0.0
    %159 = vmatpush1.msra.mxu0 %v135
    %160 = vmatprep.subr.mxu0 0.0
    %161 = vmatpush1.msra.mxu0 %v136
    %162 = vmatprep.subr.mxu0 0.0
    %163 = vmatpush1.msra.mxu0 %v137
    %164 = vmatprep.subr.mxu0 0.0
    %165 = vmatpush1.msra.mxu0 %v138
    %166 = vmatprep.subr.mxu0 0.0
    %167 = vmatpush1.msra.mxu0 %v139
    %168 = vmatprep.subr.mxu0 0.0
    %169 = vmatpush1.msra.mxu0 %v140
    %170 = vmatprep.subr.mxu0 0.0
    %171 = vmatpush1.msra.mxu0 %v141
    %172 = vmatprep.subr.mxu0 0.0
    %173 = vmatpush1.msra.mxu0 %v142
    %174 = vmatprep.subr.mxu0 0.0
    %175 = vmatpush1.msra.mxu0 %v143
    %176 = vmatprep.subr.mxu0 0.0
    %177 = vmatpush1.msra.mxu0 %v144
    %178 = vmatprep.subr.mxu0 0.0
    %179 = vmatpush1.msra.mxu0 %v145
    %180 = vmatprep.subr.mxu0 0.0
    %181 = vmatpush1.msra.mxu0 %v146
    %182 = vmatprep.subr.mxu0 0.0
    %183 = vmatpush1.msra.mxu0 %v147
    %184 = vmatprep.subr.mxu0 0.0
    %185 = vmatpush1.msra.mxu0 %v148
    %186 = vmatprep.subr.mxu0 0.0
    %187 = vmatpush1.msra.mxu0 0.0
    %188 = vmatprep.subr.mxu0 0.0
    %189 = vmatpush1.msra.mxu0 0.0
    %190 = vmatprep.subr.mxu0 0.0
    %191 = vmatpush1.msra.mxu0 0.0
    %192 = vmatprep.subr.mxu0 0.0
    %193 = vmatpush1.msra.mxu0 0.0
    %194 = vmatprep.subr.mxu0 0.0
    %195 = vmatpush1.msra.mxu0 0.0
    %196 = vmatprep.subr.mxu0 0.0
    %197 = vmatpush1.msra.mxu0 0.0
    %198 = vmatprep.subr.mxu0 0.0
    %199 = vmatpush1.msra.mxu0 0.0
    %200 = vmatprep.subr.mxu0 0.0
    %201 = vmatpush1.msra.mxu0 0.0
    %202 = vmatprep.subr.mxu0 0.0
    %203 = vmatpush1.msra.mxu0 0.0
    %204 = vmatprep.subr.mxu0 0.0
    %205 = vmatpush1.msra.mxu0 0.0
    %206 = vmatprep.subr.mxu0 0.0
    %207 = vmatpush1.msra.mxu0 0.0
    %208 = vmatprep.subr.mxu0 0.0
    %209 = vmatpush1.msra.mxu0 0.0
    %210 = vmatprep.subr.mxu0 0.0
    %211 = vmatpush1.msra.mxu0 0.0
    %212 = vmatprep.subr.mxu0 0.0
    %213 = vmatpush1.msra.mxu0 0.0
    %214 = vmatprep.subr.mxu0 0.0
    %215 = vmatpush1.msra.mxu0 0.0
    %216 = vmatprep.subr.mxu0 0.0
    %217 = vmatpush1.msra.mxu0 0.0
    %218 = vmatprep.mubr.f32.mxu0 0.0
    %219 = vmatmul.mubr.f32.gmra.mrb[0].mxu0 %v125
    %v220 = vpop.f32.mrb[0].mxu0
    %v221 = vadd.f32 %v153, %v220
    %v222 = vpop.f32.mrb[0].mxu0
    %223 = vmatprep.mubr.f32.mxu0 0.0
    %224 = vmatmul.mubr.f32.gmra.mrb[0].mxu0 %v130
    %v225 = vpop.f32.mrb[0].mxu0
    %v226 = vadd.f32 %v153, %v225
    %v227 = vpop.f32.mrb[0].mxu0
    %228 = vdwg.mxu0
    %v229 = vmax.f32 %v221, 0.0
    %v230 = vmax.f32 %v226, 0.0
    %v231 = vld [vmem:[%s3] sm:$0xff]
    %v232 = vld [vmem:[%s3 + $0x8] sm:$0xff]
    %v233 = vld [vmem:[%s3 + $0x10] sm:$0xff]
    %v234 = vld [vmem:[%s3 + $0x18] sm:$0xff]
    %v235 = vld [vmem:[%s3 + $0x20] sm:$0xff]
    %v236 = vld [vmem:[%s3 + $0x28] sm:$0xff]
    %v237 = vld [vmem:[%s3 + $0x30] sm:$0xff]
    %v238 = vld [vmem:[%s3 + $0x38] sm:$0xff]
    %v239 = vld [vmem:[%s3 + $0x40] sm:$0xff]
    %v240 = vld [vmem:[%s3 + $0x48] sm:$0xff]
    %v241 = vld [vmem:[%s3 + $0x50] sm:$0xff]
    %v242 = vld [vmem:[%s3 + $0x58] sm:$0xff]
    %v243 = vld [vmem:[%s3 + $0x60] sm:$0xff]
    %v244 = vld [vmem:[%s3 + $0x68] sm:$0xff]
    %v245 = vld [vmem:[%s3 + $0x70] sm:$0xff]
    %v246 = vld [vmem:[%s3 + $0x78] sm:$0xff]
    %v247 = vld [vmem:[%s4 + $0x1] sm:$0x1]
    %v248 = vlaneseq
    %v249 = vshrl.u32 %v248, 7
    %v250 = vsub.s32 0, %v249
    %v251 = vrot.slane %v247, %v250
    %252 = vmatprep.subr.mxu0 0.0
    %253 = vmatpush1.msra.mxu0 %v231
    %254 = vmatprep.subr.mxu0 0.0
    %255 = vmatpush1.msra.mxu0 %v232
    %256 = vmatprep.subr.mxu0 0.0
    %257 = vmatpush1.msra.mxu0 %v233
    %258 = vmatprep.subr.mxu0 0.0
    %259 = vmatpush1.msra.mxu0 %v234
    %260 = vmatprep.subr.mxu0 0.0
    %261 = vmatpush1.msra.mxu0 %v235
    %262 = vmatprep.subr.mxu0 0.0
    %263 = vmatpush1.msra.mxu0 %v236
    %264 = vmatprep.subr.mxu0 0.0
    %265 = vmatpush1.msra.mxu0 %v237
    %266 = vmatprep.subr.mxu0 0.0
    %267 = vmatpush1.msra.mxu0 %v238
    %268 = vmatprep.subr.mxu0 0.0
    %269 = vmatpush1.msra.mxu0 %v239
    %270 = vmatprep.subr.mxu0 0.0
    %271 = vmatpush1.msra.mxu0 %v240
    %272 = vmatprep.subr.mxu0 0.0
    %273 = vmatpush1.msra.mxu0 %v241
    %274 = vmatprep.subr.mxu0 0.0
    %275 = vmatpush1.msra.mxu0 %v242
    %276 = vmatprep.subr.mxu0 0.0
    %277 = vmatpush1.msra.mxu0 %v243
    %278 = vmatprep.subr.mxu0 0.0
    %279 = vmatpush1.msra.mxu0 %v244
    %280 = vmatprep.subr.mxu0 0.0
    %281 = vmatpush1.msra.mxu0 %v245
    %282 = vmatprep.subr.mxu0 0.0
    %283 = vmatpush1.msra.mxu0 %v246
    %284 = vmatprep.subr.mxu0 0.0
    %285 = vmatpush1.msra.mxu0 0.0
    %286 = vmatprep.subr.mxu0 0.0
    %287 = vmatpush1.msra.mxu0 0.0
    %288 = vmatprep.subr.mxu0 0.0
    %289 = vmatpush1.msra.mxu0 0.0
    %290 = vmatprep.subr.mxu0 0.0
    %291 = vmatpush1.msra.mxu0 0.0
    %292 = vmatprep.subr.mxu0 0.0
    %293 = vmatpush1.msra.mxu0 0.0
    %294 = vmatprep.subr.mxu0 0.0
    %295 = vmatpush1.msra.mxu0 0.0
    %296 = vmatprep.subr.mxu0 0.0
    %297 = vmatpush1.msra.mxu0 0.0
    %298 = vmatprep.subr.mxu0 0.0
    %299 = vmatpush1.msra.mxu0 0.0
    %300 = vmatprep.subr.mxu0 0.0
    %301 = vmatpush1.msra.mxu0 0.0
    %302 = vmatprep.subr.mxu0 0.0
    %303 = vmatpush1.msra.mxu0 0.0
    %304 = vmatprep.subr.mxu0 0.0
    %305 = vmatpush1.msra.mxu0 0.0
    %306 = vmatprep.subr.mxu0 0.0
    %307 = vmatpush1.msra.mxu0 0.0
    %308 = vmatprep.subr.mxu0 0.0
    %309 = vmatpush1.msra.mxu0 0.0
    %310 = vmatprep.subr.mxu0 0.0
    %311 = vmatpush1.msra.mxu0 0.0
    %312 = vmatprep.subr.mxu0 0.0
    %313 = vmatpush1.msra.mxu0 0.0
    %314 = vmatprep.subr.mxu0 0.0
    %315 = vmatpush1.msra.mxu0 0.0
    %316 = vmatprep.mubr.f32.mxu0 0.0
    %317 = vmatmul.mubr.f32.gmra.mrb[0].mxu0 %v229
    %v318 = vpop.f32.mrb[0].mxu0
    %v319 = vadd.f32 %v251, %v318
    %v320 = vpop.f32.mrb[0].mxu0
    %321 = vmatprep.mubr.f32.mxu0 0.0
    %322 = vmatmul.mubr.f32.gmra.mrb[0].mxu0 %v230
    %v323 = vpop.f32.mrb[0].mxu0
    %v324 = vadd.f32 %v251, %v323
    %v325 = vpop.f32.mrb[0].mxu0
    %326 = vdwg.mxu0
    %v327 = vmax.f32 %v319, 0.0
    %v328 = vmax.f32 %v324, 0.0
    %v329 = vadd.f32 %v327, %v328
    %v330 = vrot.slane %v329, 4
    %v331 = vadd.f32 %v329, %v330
    %v332 = vrot.slane %v331, 2
    %v333 = vadd.f32 %v331, %v332
    %v334 = vrot.slane %v333, 1
    %v335 = vadd.f32 %v333, %v334
    %v336 = vrcp.pop 16.0
    %v337 = vmul.f32 %v335, %v336
    %v338 = vsub.f32 %v327, %v337
    %v339 = vsub.f32 %v328, %v337
    %v340 = vmul.f32 %v338, %v338
    %v341 = vmul.f32 %v339, %v339
    %v342 = vadd.f32 %v340, %v341
    %v343 = vrot.slane %v342, 4
    %v344 = vadd.f32 %v342, %v343
    %v345 = vrot.slane %v344, 2
    %v346 = vadd.f32 %v344, %v345
    %v347 = vrot.slane %v346, 1
    %v348 = vadd.f32 %v346, %v347
    %v349 = vmul.f32 %v348, %v336
    %v350 = vadd.f32 %v349, 1e-05
    %v351 = vrsqrt.pop %v350
    %v352 = vmul.f32 %v338, %v351
    %v353 = vmul.f32 %v339, %v351
    %354 = vst [vmem:[#allocation2] sm:$0xff] %v352
    %355 = vst [vmem:[#allocation2 + $0x18] sm:$0xff] %v353
    %356 = vmatprep.subr.mxu0 0.0
    %357 = vmatpush1.msra.mxu0 %v352
    %358 = vmatprep.subr.mxu0 0.0
    %359 = vmatpush1.msra.mxu0 %v353
    %360 = vmatprep.subr.mxu0 0.0
    %361 = vmatpush1.msra.mxu0 0.0
    %362 = vmatprep.subr.mxu0 0.0
    %363 = vmatpush1.msra.mxu0 0.0
    %364 = vmatprep.subr.mxu0 0.0
    %365 = vmatpush1.msra.mxu0 0.0
    %366 = vmatprep.subr.mxu0 0.0
    %367 = vmatpush1.msra.mxu0 0.0
    %368 = vmatprep.subr.mxu0 0.0
    %369 = vmatpush1.msra.mxu0 0.0
    %370 = vmatprep.subr.mxu0 0.0
    %371 = vmatpush1.msra.mxu0 0.0
    %372 = vmatprep.subr.mxu0 0.0
    %373 = vmatpush1.msra.mxu0 0.0
    %374 = vmatprep.subr.mxu0 0.0
    %375 = vmatpush1.msra.mxu0 0.0
    %376 = vmatprep.subr.mxu0 0.0
    %377 = vmatpush1.msra.mxu0 0.0
    %378 = vmatprep.subr.mxu0 0.0
    %379 = vmatpush1.msra.mxu0 0.0
    %380 = vmatprep.subr.mxu0 0.0
    %381 = vmatpush1.msra.mxu0 0.0
    %382 = vmatprep.subr.mxu0 0.0
    %383 = vmatpush1.msra.mxu0 0.0
    %384 = vmatprep.subr.mxu0 0.0
    %385 = vmatpush1.msra.mxu0 0.0
    %386 = vmatprep.subr.mxu0 0.0
    %387 = vmatpush1.msra.mxu0 0.0
    %388 = vmatprep.subr.mxu0 0.0
    %389 = vmatpush1.msra.mxu0 0.0
    %390 = vmatprep.subr.mxu0 0.0
    %391 = vmatpush1.msra.mxu0 0.0
    %392 = vmatprep.subr.mxu0 0.0
    %393 = vmatpush1.msra.mxu0 0.0
    %394 = vmatprep.subr.mxu0 0.0
    %395 = vmatpush1.msra.mxu0 0.0
    %396 = vmatprep.subr.mxu0 0.0
    %397 = vmatpush1.msra.mxu0 0.0
    %398 = vmatprep.subr.mxu0 0.0
    %399 = vmatpush1.msra.mxu0 0.0
    %400 = vmatprep.subr.mxu0 0.0
    %401 = vmatpush1.msra.mxu0 0.0
    %402 = vmatprep.subr.mxu0 0.0
    %403 = vmatpush1.msra.mxu0 0.0
    %404 = vmatprep.subr.mxu0 0.0
    %405 = vmatpush1.msra.mxu0 0.0
    %406 = vmatprep.subr.mxu0 0.0
    %407 = vmatpush1.msra.mxu0 0.0
    %408 = vmatprep.subr.mxu0 0.0
    %409 = vmatpush1.msra.mxu0 0.0
    %410 = vmatprep.subr.mxu0 0.0
    %411 = vmatpush1.msra.mxu0 0.0
    %412 = vmatprep.subr.mxu0 0.0
    %413 = vmatpush1.msra.mxu0 0.0
    %414 = vmatprep.subr.mxu0 0.0
    %415 = vmatpush1.msra.mxu0 0.0
    %416 = vmatprep.subr.mxu0 0.0
    %417 = vmatpush1.msra.mxu0 0.0
    %418 = vmatprep.subr.mxu0 0.0
    %419 = vmatpush1.msra.mxu0 0.0
    %420 = vmatprep.mubr.f32.mxu0 0.0
    %421 = vmatmul.mubr.f32.gmra.mrb[0].mxu0 %v53
    %v422 = vpop.f32.mrb[0].mxu0
    %v423 = vadd.f32 0.0, %v422
    %v424 = vpop.f32.mrb[0].mxu0
    %425 = vmatprep.mubr.f32.mxu0 0.0
    %426 = vmatmul.mubr.f32.gmra.mrb[0].mxu0 %v56
    %v427 = vpop.f32.mrb[0].mxu0
    %v428 = vadd.f32 0.0, %v427
    %v429 = vpop.f32.mrb[0].mxu0
    %430 = vdwg.mxu0
    %s431 = scalar_lea.vmem %s2, 128
    %v432 = vld [vmem:[%s431] sm:$0xff]
    %v433 = vld [vmem:[%s431 + $0x8] sm:$0xff]
    %v434 = vld [vmem:[%s431 + $0x10] sm:$0xff]
    %v435 = vld [vmem:[%s431 + $0x18] sm:$0xff]
    %v436 = vld [vmem:[%s431 + $0x20] sm:$0xff]
    %v437 = vld [vmem:[%s431 + $0x28] sm:$0xff]
    %v438 = vld [vmem:[%s431 + $0x30] sm:$0xff]
    %v439 = vld [vmem:[%s431 + $0x38] sm:$0xff]
    %v440 = vld [vmem:[%s431 + $0x40] sm:$0xff]
    %v441 = vld [vmem:[%s431 + $0x48] sm:$0xff]
    %v442 = vld [vmem:[%s431 + $0x50] sm:$0xff]
    %v443 = vld [vmem:[%s431 + $0x58] sm:$0xff]
    %v444 = vld [vmem:[%s431 + $0x60] sm:$0xff]
    %v445 = vld [vmem:[%s431 + $0x68] sm:$0xff]
    %v446 = vld [vmem:[%s431 + $0x70] sm:$0xff]
    %v447 = vld [vmem:[%s431 + $0x78] sm:$0xff]
    %v448 = vld [vmem:[%s4 + $0x2] sm:$0x1]
    %v449 = vlaneseq
    %v450 = vshrl.u32 %v449, 7
    %v451 = vsub.s32 0, %v450
    %v452 = vrot.slane %v448, %v451
    %453 = vmatprep.subr.mxu0 0.0
    %454 = vmatpush1.msra.mxu0 %v432
    %455 = vmatprep.subr.mxu0 0.0
    %456 = vmatpush1.msra.mxu0 %v433
    %457 = vmatprep.subr.mxu0 0.0
    %458 = vmatpush1.msra.mxu0 %v434
    %459 = vmatprep.subr.mxu0 0.0
    %460 = vmatpush1.msra.mxu0 %v435
    %461 = vmatprep.subr.mxu0 0.0
    %462 = vmatpush1.msra.mxu0 %v436
    %463 = vmatprep.subr.mxu0 0.0
    %464 = vmatpush1.msra.mxu0 %v437
    %465 = vmatprep.subr.mxu0 0.0
    %466 = vmatpush1.msra.mxu0 %v438
    %467 = vmatprep.subr.mxu0 0.0
    %468 = vmatpush1.msra.mxu0 %v439
    %469 = vmatprep.subr.mxu0 0.0
    %470 = vmatpush1.msra.mxu0 %v440
    %471 = vmatprep.subr.mxu0 0.0
    %472 = vmatpush1.msra.mxu0 %v441
    %473 = vmatprep.subr.mxu0 0.0
    %474 = vmatpush1.msra.mxu0 %v442
    %475 = vmatprep.subr.mxu0 0.0
    %476 = vmatpush1.msra.mxu0 %v443
    %477 = vmatprep.subr.mxu0 0.0
    %478 = vmatpush1.msra.mxu0 %v444
    %479 = vmatprep.subr.mxu0 0.0
    %480 = vmatpush1.msra.mxu0 %v445
    %481 = vmatprep.subr.mxu0 0.0
    %482 = vmatpush1.msra.mxu0 %v446
    %483 = vmatprep.subr.mxu0 0.0
    %484 = vmatpush1.msra.mxu0 %v447
    %485 = vmatprep.subr.mxu0 0.0
    %486 = vmatpush1.msra.mxu0 0.0
    %487 = vmatprep.subr.mxu0 0.0
    %488 = vmatpush1.msra.mxu0 0.0
    %489 = vmatprep.subr.mxu0 0.0
    %490 = vmatpush1.msra.mxu0 0.0
    %491 = vmatprep.subr.mxu0 0.0
    %492 = vmatpush1.msra.mxu0 0.0
    %493 = vmatprep.subr.mxu0 0.0
    %494 = vmatpush1.msra.mxu0 0.0
    %495 = vmatprep.subr.mxu0 0.0
    %496 = vmatpush1.msra.mxu0 0.0
    %497 = vmatprep.subr.mxu0 0.0
    %498 = vmatpush1.msra.mxu0 0.0
    %499 = vmatprep.subr.mxu0 0.0
    %500 = vmatpush1.msra.mxu0 0.0
    %501 = vmatprep.subr.mxu0 0.0
    %502 = vmatpush1.msra.mxu0 0.0
    %503 = vmatprep.subr.mxu0 0.0
    %504 = vmatpush1.msra.mxu0 0.0
    %505 = vmatprep.subr.mxu0 0.0
    %506 = vmatpush1.msra.mxu0 0.0
    %507 = vmatprep.subr.mxu0 0.0
    %508 = vmatpush1.msra.mxu0 0.0
    %509 = vmatprep.subr.mxu0 0.0
    %510 = vmatpush1.msra.mxu0 0.0
    %511 = vmatprep.subr.mxu0 0.0
    %512 = vmatpush1.msra.mxu0 0.0
    %513 = vmatprep.subr.mxu0 0.0
    %514 = vmatpush1.msra.mxu0 0.0
    %515 = vmatprep.subr.mxu0 0.0
    %516 = vmatpush1.msra.mxu0 0.0
    %517 = vmatprep.mubr.f32.mxu0 0.0
    %518 = vmatmul.mubr.f32.gmra.mrb[0].mxu0 %v423
    %v519 = vpop.f32.mrb[0].mxu0
    %v520 = vadd.f32 %v452, %v519
    %v521 = vpop.f32.mrb[0].mxu0
    %522 = vmatprep.mubr.f32.mxu0 0.0
    %523 = vmatmul.mubr.f32.gmra.mrb[0].mxu0 %v428
    %v524 = vpop.f32.mrb[0].mxu0
    %v525 = vadd.f32 %v452, %v524
    %v526 = vpop.f32.mrb[0].mxu0
    %527 = vdwg.mxu0
    %v528 = vmax.f32 %v520, 0.0
    %v529 = vmax.f32 %v525, 0.0
    %s530 = scalar_lea.vmem %s3, 128
    %v531 = vld [vmem:[%s530] sm:$0xff]
    %v532 = vld [vmem:[%s530 + $0x8] sm:$0xff]
    %v533 = vld [vmem:[%s530 + $0x10] sm:$0xff]
    %v534 = vld [vmem:[%s530 + $0x18] sm:$0xff]
    %v535 = vld [vmem:[%s530 + $0x20] sm:$0xff]
    %v536 = vld [vmem:[%s530 + $0x28] sm:$0xff]
    %v537 = vld [vmem:[%s530 + $0x30] sm:$0xff]
    %v538 = vld [vmem:[%s530 + $0x38] sm:$0xff]
    %v539 = vld [vmem:[%s530 + $0x40] sm:$0xff]
    %v540 = vld [vmem:[%s530 + $0x48] sm:$0xff]
    %v541 = vld [vmem:[%s530 + $0x50] sm:$0xff]
    %v542 = vld [vmem:[%s530 + $0x58] sm:$0xff]
    %v543 = vld [vmem:[%s530 + $0x60] sm:$0xff]
    %v544 = vld [vmem:[%s530 + $0x68] sm:$0xff]
    %v545 = vld [vmem:[%s530 + $0x70] sm:$0xff]
    %v546 = vld [vmem:[%s530 + $0x78] sm:$0xff]
    %v547 = vld [vmem:[%s4 + $0x3] sm:$0x1]
    %v548 = vlaneseq
    %v549 = vshrl.u32 %v548, 7
    %v550 = vsub.s32 0, %v549
    %v551 = vrot.slane %v547, %v550
    %552 = vmatprep.subr.mxu0 0.0
    %553 = vmatpush1.msra.mxu0 %v531
    %554 = vmatprep.subr.mxu0 0.0
    %555 = vmatpush1.msra.mxu0 %v532
    %556 = vmatprep.subr.mxu0 0.0
    %557 = vmatpush1.msra.mxu0 %v533
    %558 = vmatprep.subr.mxu0 0.0
    %559 = vmatpush1.msra.mxu0 %v534
    %560 = vmatprep.subr.mxu0 0.0
    %561 = vmatpush1.msra.mxu0 %v535
    %562 = vmatprep.subr.mxu0 0.0
    %563 = vmatpush1.msra.mxu0 %v536
    %564 = vmatprep.subr.mxu0 0.0
    %565 = vmatpush1.msra.mxu0 %v537
    %566 = vmatprep.subr.mxu0 0.0
    %567 = vmatpush1.msra.mxu0 %v538
    %568 = vmatprep.subr.mxu0 0.0
    %569 = vmatpush1.msra.mxu0 %v539
    %570 = vmatprep.subr.mxu0 0.0
    %571 = vmatpush1.msra.mxu0 %v540
    %572 = vmatprep.subr.mxu0 0.0
    %573 = vmatpush1.msra.mxu0 %v541
    %574 = vmatprep.subr.mxu0 0.0
    %575 = vmatpush1.msra.mxu0 %v542
    %576 = vmatprep.subr.mxu0 0.0
    %577 = vmatpush1.msra.mxu0 %v543
    %578 = vmatprep.subr.mxu0 0.0
    %579 = vmatpush1.msra.mxu0 %v544
    %580 = vmatprep.subr.mxu0 0.0
    %581 = vmatpush1.msra.mxu0 %v545
    %582 = vmatprep.subr.mxu0 0.0
    %583 = vmatpush1.msra.mxu0 %v546
    %584 = vmatprep.subr.mxu0 0.0
    %585 = vmatpush1.msra.mxu0 0.0
    %586 = vmatprep.subr.mxu0 0.0
    %587 = vmatpush1.msra.mxu0 0.0
    %588 = vmatprep.subr.mxu0 0.0
    %589 = vmatpush1.msra.mxu0 0.0
    %590 = vmatprep.subr.mxu0 0.0
    %591 = vmatpush1.msra.mxu0 0.0
    %592 = vmatprep.subr.mxu0 0.0
    %593 = vmatpush1.msra.mxu0 0.0
    %594 = vmatprep.subr.mxu0 0.0
    %595 = vmatpush1.msra.mxu0 0.0
    %596 = vmatprep.subr.mxu0 0.0
    %597 = vmatpush1.msra.mxu0 0.0
    %598 = vmatprep.subr.mxu0 0.0
    %599 = vmatpush1.msra.mxu0 0.0
    %600 = vmatprep.subr.mxu0 0.0
    %601 = vmatpush1.msra.mxu0 0.0
    %602 = vmatprep.subr.mxu0 0.0
    %603 = vmatpush1.msra.mxu0 0.0
    %604 = vmatprep.subr.mxu0 0.0
    %605 = vmatpush1.msra.mxu0 0.0
    %606 = vmatprep.subr.mxu0 0.0
    %607 = vmatpush1.msra.mxu0 0.0
    %608 = vmatprep.subr.mxu0 0.0
    %609 = vmatpush1.msra.mxu0 0.0
    %610 = vmatprep.subr.mxu0 0.0
    %611 = vmatpush1.msra.mxu0 0.0
    %612 = vmatprep.subr.mxu0 0.0
    %613 = vmatpush1.msra.mxu0 0.0
    %614 = vmatprep.subr.mxu0 0.0
    %615 = vmatpush1.msra.mxu0 0.0
    %616 = vmatprep.mubr.f32.mxu0 0.0
    %617 = vmatmul.mubr.f32.gmra.mrb[0].mxu0 %v528
    %v618 = vpop.f32.mrb[0].mxu0
    %v619 = vadd.f32 %v551, %v618
    %v620 = vpop.f32.mrb[0].mxu0
    %621 = vmatprep.mubr.f32.mxu0 0.0
    %622 = vmatmul.mubr.f32.gmra.mrb[0].mxu0 %v529
    %v623 = vpop.f32.mrb[0].mxu0
    %v624 = vadd.f32 %v551, %v623
    %v625 = vpop.f32.mrb[0].mxu0
    %626 = vdwg.mxu0
    %v627 = vmax.f32 %v619, 0.0
    %v628 = vmax.f32 %v624, 0.0
    %v629 = vadd.f32 %v627, %v628
    %v630 = vrot.slane %v629, 4
    %v631 = vadd.f32 %v629, %v630
    %v632 = vrot.slane %v631, 2
    %v633 = vadd.f32 %v631, %v632
    %v634 = vrot.slane %v633, 1
    %v635 = vadd.f32 %v633, %v634
    %v636 = vmul.f32 %v635, %v336
    %v637 = vsub.f32 %v627, %v636
    %v638 = vsub.f32 %v628, %v636
    %v639 = vmul.f32 %v637, %v637
    %v640 = vmul.f32 %v638, %v638
    %v641 = vadd.f32 %v639, %v640
    %v642 = vrot.slane %v641, 4
    %v643 = vadd.f32 %v641, %v642
    %v644 = vrot.slane %v643, 2
    %v645 = vadd.f32 %v643, %v644
    %v646 = vrot.slane %v645, 1
    %v647 = vadd.f32 %v645, %v646
    %v648 = vmul.f32 %v647, %v336
    %v649 = vadd.f32 %v648, 1e-05
    %v650 = vrsqrt.pop %v649
    %v651 = vmul.f32 %v637, %v650
    %v652 = vmul.f32 %v638, %v650
    %653 = vst [vmem:[#allocation2 + $0x8] sm:$0xff] %v651
    %654 = vst [vmem:[#allocation2 + $0x20] sm:$0xff] %v652
    %655 = vmatprep.subr.mxu0 0.0
    %656 = vmatpush1.msra.mxu0 %v651
    %657 = vmatprep.subr.mxu0 0.0
    %658 = vmatpush1.msra.mxu0 %v652
    %659 = vmatprep.subr.mxu0 0.0
    %660 = vmatpush1.msra.mxu0 0.0
    %661 = vmatprep.subr.mxu0 0.0
    %662 = vmatpush1.msra.mxu0 0.0
    %663 = vmatprep.subr.mxu0 0.0
    %664 = vmatpush1.msra.mxu0 0.0
    %665 = vmatprep.subr.mxu0 0.0
    %666 = vmatpush1.msra.mxu0 0.0
    %667 = vmatprep.subr.mxu0 0.0
    %668 = vmatpush1.msra.mxu0 0.0
    %669 = vmatprep.subr.mxu0 0.0
    %670 = vmatpush1.msra.mxu0 0.0
    %671 = vmatprep.subr.mxu0 0.0
    %672 = vmatpush1.msra.mxu0 0.0
    %673 = vmatprep.subr.mxu0 0.0
    %674 = vmatpush1.msra.mxu0 0.0
    %675 = vmatprep.subr.mxu0 0.0
    %676 = vmatpush1.msra.mxu0 0.0
    %677 = vmatprep.subr.mxu0 0.0
    %678 = vmatpush1.msra.mxu0 0.0
    %679 = vmatprep.subr.mxu0 0.0
    %680 = vmatpush1.msra.mxu0 0.0
    %681 = vmatprep.subr.mxu0 0.0
    %682 = vmatpush1.msra.mxu0 0.0
    %683 = vmatprep.subr.mxu0 0.0
    %684 = vmatpush1.msra.mxu0 0.0
    %685 = vmatprep.subr.mxu0 0.0
    %686 = vmatpush1.msra.mxu0 0.0
    %687 = vmatprep.subr.mxu0 0.0
    %688 = vmatpush1.msra.mxu0 0.0
    %689 = vmatprep.subr.mxu0 0.0
    %690 = vmatpush1.msra.mxu0 0.0
    %691 = vmatprep.subr.mxu0 0.0
    %692 = vmatpush1.msra.mxu0 0.0
    %693 = vmatprep.subr.mxu0 0.0
    %694 = vmatpush1.msra.mxu0 0.0
    %695 = vmatprep.subr.mxu0 0.0
    %696 = vmatpush1.msra.mxu0 0.0
    %697 = vmatprep.subr.mxu0 0.0
    %698 = vmatpush1.msra.mxu0 0.0
    %699 = vmatprep.subr.mxu0 0.0
    %700 = vmatpush1.msra.mxu0 0.0
    %701 = vmatprep.subr.mxu0 0.0
    %702 = vmatpush1.msra.mxu0 0.0
    %703 = vmatprep.subr.mxu0 0.0
    %704 = vmatpush1.msra.mxu0 0.0
    %705 = vmatprep.subr.mxu0 0.0
    %706 = vmatpush1.msra.mxu0 0.0
    %707 = vmatprep.subr.mxu0 0.0
    %708 = vmatpush1.msra.mxu0 0.0
    %709 = vmatprep.subr.mxu0 0.0
    %710 = vmatpush1.msra.mxu0 0.0
    %711 = vmatprep.subr.mxu0 0.0
    %712 = vmatpush1.msra.mxu0 0.0
    %713 = vmatprep.subr.mxu0 0.0
    %714 = vmatpush1.msra.mxu0 0.0
    %715 = vmatprep.subr.mxu0 0.0
    %716 = vmatpush1.msra.mxu0 0.0
    %717 = vmatprep.subr.mxu0 0.0
    %718 = vmatpush1.msra.mxu0 0.0
    %719 = vmatprep.mubr.f32.mxu0 0.0
    %720 = vmatmul.mubr.f32.gmra.mrb[0].mxu0 %v53
    %v721 = vpop.f32.mrb[0].mxu0
    %v722 = vadd.f32 0.0, %v721
    %v723 = vpop.f32.mrb[0].mxu0
    %724 = vmatprep.mubr.f32.mxu0 0.0
    %725 = vmatmul.mubr.f32.gmra.mrb[0].mxu0 %v56
    %v726 = vpop.f32.mrb[0].mxu0
    %v727 = vadd.f32 0.0, %v726
    %v728 = vpop.f32.mrb[0].mxu0
    %729 = vdwg.mxu0
    %s730 = scalar_lea.vmem %s2, 256
    %v731 = vld [vmem:[%s730] sm:$0xff]
    %v732 = vld [vmem:[%s730 + $0x8] sm:$0xff]
    %v733 = vld [vmem:[%s730 + $0x10] sm:$0xff]
    %v734 = vld [vmem:[%s730 + $0x18] sm:$0xff]
    %v735 = vld [vmem:[%s730 + $0x20] sm:$0xff]
    %v736 = vld [vmem:[%s730 + $0x28] sm:$0xff]
    %v737 = vld [vmem:[%s730 + $0x30] sm:$0xff]
    %v738 = vld [vmem:[%s730 + $0x38] sm:$0xff]
    %v739 = vld [vmem:[%s730 + $0x40] sm:$0xff]
    %v740 = vld [vmem:[%s730 + $0x48] sm:$0xff]
    %v741 = vld [vmem:[%s730 + $0x50] sm:$0xff]
    %v742 = vld [vmem:[%s730 + $0x58] sm:$0xff]
    %v743 = vld [vmem:[%s730 + $0x60] sm:$0xff]
    %v744 = vld [vmem:[%s730 + $0x68] sm:$0xff]
    %v745 = vld [vmem:[%s730 + $0x70] sm:$0xff]
    %v746 = vld [vmem:[%s730 + $0x78] sm:$0xff]
    %v747 = vld [vmem:[%s4 + $0x4] sm:$0x1]
    %v748 = vlaneseq
    %v749 = vshrl.u32 %v748, 7
    %v750 = vsub.s32 0, %v749
    %v751 = vrot.slane %v747, %v750
    %752 = vmatprep.subr.mxu0 0.0
    %753 = vmatpush1.msra.mxu0 %v731
    %754 = vmatprep.subr.mxu0 0.0
    %755 = vmatpush1.msra.mxu0 %v732
    %756 = vmatprep.subr.mxu0 0.0
    %757 = vmatpush1.msra.mxu0 %v733
    %758 = vmatprep.subr.mxu0 0.0
    %759 = vmatpush1.msra.mxu0 %v734
    %760 = vmatprep.subr.mxu0 0.0
    %761 = vmatpush1.msra.mxu0 %v735
    %762 = vmatprep.subr.mxu0 0.0
    %763 = vmatpush1.msra.mxu0 %v736
    %764 = vmatprep.subr.mxu0 0.0
    %765 = vmatpush1.msra.mxu0 %v737
    %766 = vmatprep.subr.mxu0 0.0
    %767 = vmatpush1.msra.mxu0 %v738
    %768 = vmatprep.subr.mxu0 0.0
    %769 = vmatpush1.msra.mxu0 %v739
    %770 = vmatprep.subr.mxu0 0.0
    %771 = vmatpush1.msra.mxu0 %v740
    %772 = vmatprep.subr.mxu0 0.0
    %773 = vmatpush1.msra.mxu0 %v741
    %774 = vmatprep.subr.mxu0 0.0
    %775 = vmatpush1.msra.mxu0 %v742
    %776 = vmatprep.subr.mxu0 0.0
    %777 = vmatpush1.msra.mxu0 %v743
    %778 = vmatprep.subr.mxu0 0.0
    %779 = vmatpush1.msra.mxu0 %v744
    %780 = vmatprep.subr.mxu0 0.0
    %781 = vmatpush1.msra.mxu0 %v745
    %782 = vmatprep.subr.mxu0 0.0
    %783 = vmatpush1.msra.mxu0 %v746
    %784 = vmatprep.subr.mxu0 0.0
    %785 = vmatpush1.msra.mxu0 0.0
    %786 = vmatprep.subr.mxu0 0.0
    %787 = vmatpush1.msra.mxu0 0.0
    %788 = vmatprep.subr.mxu0 0.0
    %789 = vmatpush1.msra.mxu0 0.0
    %790 = vmatprep.subr.mxu0 0.0
    %791 = vmatpush1.msra.mxu0 0.0
    %792 = vmatprep.subr.mxu0 0.0
    %793 = vmatpush1.msra.mxu0 0.0
    %794 = vmatprep.subr.mxu0 0.0
    %795 = vmatpush1.msra.mxu0 0.0
    %796 = vmatprep.subr.mxu0 0.0
    %797 = vmatpush1.msra.mxu0 0.0
    %798 = vmatprep.subr.mxu0 0.0
    %799 = vmatpush1.msra.mxu0 0.0
    %800 = vmatprep.subr.mxu0 0.0
    %801 = vmatpush1.msra.mxu0 0.0
    %802 = vmatprep.subr.mxu0 0.0
    %803 = vmatpush1.msra.mxu0 0.0
    %804 = vmatprep.subr.mxu0 0.0
    %805 = vmatpush1.msra.mxu0 0.0
    %806 = vmatprep.subr.mxu0 0.0
    %807 = vmatpush1.msra.mxu0 0.0
    %808 = vmatprep.subr.mxu0 0.0
    %809 = vmatpush1.msra.mxu0 0.0
    %810 = vmatprep.subr.mxu0 0.0
    %811 = vmatpush1.msra.mxu0 0.0
    %812 = vmatprep.subr.mxu0 0.0
    %813 = vmatpush1.msra.mxu0 0.0
    %814 = vmatprep.subr.mxu0 0.0
    %815 = vmatpush1.msra.mxu0 0.0
    %816 = vmatprep.mubr.f32.mxu0 0.0
    %817 = vmatmul.mubr.f32.gmra.mrb[0].mxu0 %v722
    %v818 = vpop.f32.mrb[0].mxu0
    %v819 = vadd.f32 %v751, %v818
    %v820 = vpop.f32.mrb[0].mxu0
    %821 = vmatprep.mubr.f32.mxu0 0.0
    %822 = vmatmul.mubr.f32.gmra.mrb[0].mxu0 %v727
    %v823 = vpop.f32.mrb[0].mxu0
    %v824 = vadd.f32 %v751, %v823
    %v825 = vpop.f32.mrb[0].mxu0
    %826 = vdwg.mxu0
    %v827 = vmax.f32 %v819, 0.0
    %v828 = vmax.f32 %v824, 0.0
    %s829 = scalar_lea.vmem %s3, 256
    %v830 = vld [vmem:[%s829] sm:$0xff]
    %v831 = vld [vmem:[%s829 + $0x8] sm:$0xff]
    %v832 = vld [vmem:[%s829 + $0x10] sm:$0xff]
    %v833 = vld [vmem:[%s829 + $0x18] sm:$0xff]
    %v834 = vld [vmem:[%s829 + $0x20] sm:$0xff]
    %v835 = vld [vmem:[%s829 + $0x28] sm:$0xff]
    %v836 = vld [vmem:[%s829 + $0x30] sm:$0xff]
    %v837 = vld [vmem:[%s829 + $0x38] sm:$0xff]
    %v838 = vld [vmem:[%s829 + $0x40] sm:$0xff]
    %v839 = vld [vmem:[%s829 + $0x48] sm:$0xff]
    %v840 = vld [vmem:[%s829 + $0x50] sm:$0xff]
    %v841 = vld [vmem:[%s829 + $0x58] sm:$0xff]
    %v842 = vld [vmem:[%s829 + $0x60] sm:$0xff]
    %v843 = vld [vmem:[%s829 + $0x68] sm:$0xff]
    %v844 = vld [vmem:[%s829 + $0x70] sm:$0xff]
    %v845 = vld [vmem:[%s829 + $0x78] sm:$0xff]
    %v846 = vld [vmem:[%s4 + $0x5] sm:$0x1]
    %v847 = vlaneseq
    %v848 = vshrl.u32 %v847, 7
    %v849 = vsub.s32 0, %v848
    %v850 = vrot.slane %v846, %v849
    %851 = vmatprep.subr.mxu0 0.0
    %852 = vmatpush1.msra.mxu0 %v830
    %853 = vmatprep.subr.mxu0 0.0
    %854 = vmatpush1.msra.mxu0 %v831
    %855 = vmatprep.subr.mxu0 0.0
    %856 = vmatpush1.msra.mxu0 %v832
    %857 = vmatprep.subr.mxu0 0.0
    %858 = vmatpush1.msra.mxu0 %v833
    %859 = vmatprep.subr.mxu0 0.0
    %860 = vmatpush1.msra.mxu0 %v834
    %861 = vmatprep.subr.mxu0 0.0
    %862 = vmatpush1.msra.mxu0 %v835
    %863 = vmatprep.subr.mxu0 0.0
    %864 = vmatpush1.msra.mxu0 %v836
    %865 = vmatprep.subr.mxu0 0.0
    %866 = vmatpush1.msra.mxu0 %v837
    %867 = vmatprep.subr.mxu0 0.0
    %868 = vmatpush1.msra.mxu0 %v838
    %869 = vmatprep.subr.mxu0 0.0
    %870 = vmatpush1.msra.mxu0 %v839
    %871 = vmatprep.subr.mxu0 0.0
    %872 = vmatpush1.msra.mxu0 %v840
    %873 = vmatprep.subr.mxu0 0.0
    %874 = vmatpush1.msra.mxu0 %v841
    %875 = vmatprep.subr.mxu0 0.0
    %876 = vmatpush1.msra.mxu0 %v842
    %877 = vmatprep.subr.mxu0 0.0
    %878 = vmatpush1.msra.mxu0 %v843
    %879 = vmatprep.subr.mxu0 0.0
    %880 = vmatpush1.msra.mxu0 %v844
    %881 = vmatprep.subr.mxu0 0.0
    %882 = vmatpush1.msra.mxu0 %v845
    %883 = vmatprep.subr.mxu0 0.0
    %884 = vmatpush1.msra.mxu0 0.0
    %885 = vmatprep.subr.mxu0 0.0
    %886 = vmatpush1.msra.mxu0 0.0
    %887 = vmatprep.subr.mxu0 0.0
    %888 = vmatpush1.msra.mxu0 0.0
    %889 = vmatprep.subr.mxu0 0.0
    %890 = vmatpush1.msra.mxu0 0.0
    %891 = vmatprep.subr.mxu0 0.0
    %892 = vmatpush1.msra.mxu0 0.0
    %893 = vmatprep.subr.mxu0 0.0
    %894 = vmatpush1.msra.mxu0 0.0
    %895 = vmatprep.subr.mxu0 0.0
    %896 = vmatpush1.msra.mxu0 0.0
    %897 = vmatprep.subr.mxu0 0.0
    %898 = vmatpush1.msra.mxu0 0.0
    %899 = vmatprep.subr.mxu0 0.0
    %900 = vmatpush1.msra.mxu0 0.0
    %901 = vmatprep.subr.mxu0 0.0
    %902 = vmatpush1.msra.mxu0 0.0
    %903 = vmatprep.subr.mxu0 0.0
    %904 = vmatpush1.msra.mxu0 0.0
    %905 = vmatprep.subr.mxu0 0.0
    %906 = vmatpush1.msra.mxu0 0.0
    %907 = vmatprep.subr.mxu0 0.0
    %908 = vmatpush1.msra.mxu0 0.0
    %909 = vmatprep.subr.mxu0 0.0
    %910 = vmatpush1.msra.mxu0 0.0
    %911 = vmatprep.subr.mxu0 0.0
    %912 = vmatpush1.msra.mxu0 0.0
    %913 = vmatprep.subr.mxu0 0.0
    %914 = vmatpush1.msra.mxu0 0.0
    %915 = vmatprep.mubr.f32.mxu0 0.0
    %916 = vmatmul.mubr.f32.gmra.mrb[0].mxu0 %v827
    %v917 = vpop.f32.mrb[0].mxu0
    %v918 = vadd.f32 %v850, %v917
    %v919 = vpop.f32.mrb[0].mxu0
    %920 = vmatprep.mubr.f32.mxu0 0.0
    %921 = vmatmul.mubr.f32.gmra.mrb[0].mxu0 %v828
    %v922 = vpop.f32.mrb[0].mxu0
    %v923 = vadd.f32 %v850, %v922
    %v924 = vpop.f32.mrb[0].mxu0
    %925 = vdwg.mxu0
    %v926 = vmax.f32 %v918, 0.0
    %v927 = vmax.f32 %v923, 0.0
    %v928 = vadd.f32 %v926, %v927
    %v929 = vrot.slane %v928, 4
    %v930 = vadd.f32 %v928, %v929
    %v931 = vrot.slane %v930, 2
    %v932 = vadd.f32 %v930, %v931
    %v933 = vrot.slane %v932, 1
    %v934 = vadd.f32 %v932, %v933
    %v935 = vmul.f32 %v934, %v336
    %v936 = vsub.f32 %v926, %v935
    %v937 = vsub.f32 %v927, %v935
    %v938 = vmul.f32 %v936, %v936
    %v939 = vmul.f32 %v937, %v937
    %v940 = vadd.f32 %v938, %v939
    %v941 = vrot.slane %v940, 4
    %v942 = vadd.f32 %v940, %v941
    %v943 = vrot.slane %v942, 2
    %v944 = vadd.f32 %v942, %v943
    %v945 = vrot.slane %v944, 1
    %v946 = vadd.f32 %v944, %v945
    %v947 = vmul.f32 %v946, %v336
    %v948 = vadd.f32 %v947, 1e-05
    %v949 = vrsqrt.pop %v948
    %v950 = vmul.f32 %v936, %v949
    %v951 = vmul.f32 %v937, %v949
    %952 = vst [vmem:[#allocation2 + $0x10] sm:$0xff] %v950
    %953 = vst [vmem:[#allocation2 + $0x28] sm:$0xff] %v951
    %v954 = vld [vmem:[%s5] sm:$0x3]
    %v955 = vld [vmem:[#allocation2] sm:$0xff]
    %v956 = vld [vmem:[#allocation2 + $0x8] sm:$0xff]
    %v957 = vld [vmem:[#allocation2 + $0x10] sm:$0xff]
    %v958 = vld [vmem:[#allocation2 + $0x18] sm:$0xff]
    %v959 = vld [vmem:[#allocation2 + $0x20] sm:$0xff]
    %v960 = vld [vmem:[#allocation2 + $0x28] sm:$0xff]
    %v962 = vsel %vm51, %v954, 0
    %964 = vmatprep.subr.mxu0 %v956
    %965 = vmatpush1.msra.mxu0 %v955
    %966 = vmatprep.subr.mxu0 %v959
    %967 = vmatpush1.msra.mxu0 %v958
    %968 = vmatprep.subr.mxu0 0.0
    %969 = vmatpush1.msra.mxu0 0.0
    %970 = vmatprep.subr.mxu0 0.0
    %971 = vmatpush1.msra.mxu0 0.0
    %972 = vmatprep.subr.mxu0 0.0
    %973 = vmatpush1.msra.mxu0 0.0
    %974 = vmatprep.subr.mxu0 0.0
    %975 = vmatpush1.msra.mxu0 0.0
    %976 = vmatprep.subr.mxu0 0.0
    %977 = vmatpush1.msra.mxu0 0.0
    %978 = vmatprep.subr.mxu0 0.0
    %979 = vmatpush1.msra.mxu0 0.0
    %980 = vmatprep.subr.mxu0 0.0
    %981 = vmatpush1.msra.mxu0 0.0
    %982 = vmatprep.subr.mxu0 0.0
    %983 = vmatpush1.msra.mxu0 0.0
    %984 = vmatprep.subr.mxu0 0.0
    %985 = vmatpush1.msra.mxu0 0.0
    %986 = vmatprep.subr.mxu0 0.0
    %987 = vmatpush1.msra.mxu0 0.0
    %988 = vmatprep.subr.mxu0 0.0
    %989 = vmatpush1.msra.mxu0 0.0
    %990 = vmatprep.subr.mxu0 0.0
    %991 = vmatpush1.msra.mxu0 0.0
    %992 = vmatprep.subr.mxu0 0.0
    %993 = vmatpush1.msra.mxu0 0.0
    %994 = vmatprep.subr.mxu0 0.0
    %995 = vmatpush1.msra.mxu0 0.0
    %996 = vmatprep.subr.mxu0 0.0
    %997 = vmatpush1.msra.mxu0 0.0
    %998 = vmatprep.subr.mxu0 0.0
    %999 = vmatpush1.msra.mxu0 0.0
    %1000 = vmatprep.subr.mxu0 0.0
    %1001 = vmatpush1.msra.mxu0 0.0
    %1002 = vmatprep.subr.mxu0 0.0
    %1003 = vmatpush1.msra.mxu0 0.0
    %1004 = vmatprep.subr.mxu0 0.0
    %1005 = vmatpush1.msra.mxu0 0.0
    %1006 = vmatprep.subr.mxu0 0.0
    %1007 = vmatpush1.msra.mxu0 0.0
    %1008 = vmatprep.subr.mxu0 0.0
    %1009 = vmatpush1.msra.mxu0 0.0
    %1010 = vmatprep.subr.mxu0 0.0
    %1011 = vmatpush1.msra.mxu0 0.0
    %1012 = vmatprep.subr.mxu0 0.0
    %1013 = vmatpush1.msra.mxu0 0.0
    %1014 = vmatprep.subr.mxu0 0.0
    %1015 = vmatpush1.msra.mxu0 0.0
    %1016 = vmatprep.subr.mxu0 0.0
    %1017 = vmatpush1.msra.mxu0 0.0
    %1018 = vmatprep.subr.mxu0 0.0
    %1019 = vmatpush1.msra.mxu0 0.0
    %1020 = vmatprep.subr.mxu0 0.0
    %1021 = vmatpush1.msra.mxu0 0.0
    %1022 = vmatprep.subr.mxu0 0.0
    %1023 = vmatpush1.msra.mxu0 0.0
    %1024 = vmatprep.subr.mxu0 0.0
    %1025 = vmatpush1.msra.mxu0 0.0
    %1026 = vmatprep.subr.mxu0 0.0
    %1027 = vmatpush1.msra.mxu0 0.0
    %1028 = vmatprep.mubr.f32.mxu0 0.0
    %1029 = vmatmul.mubr.f32.gmra.mrb[0].mxu0 %v962
    %v1030 = vpop.f32.mrb[0].mxu0
    %v1031 = vadd.f32 0.0, %v1030
    %v1032 = vpop.f32.mrb[0].mxu0
    %v1033 = vadd.f32 0.0, %v1032
    %1034 = vdwg.mxu0
    %1035 = vmatprep.subr.mxu0 0.0
    %1036 = vmatpush1.msra.mxu0 %v957
    %1037 = vmatprep.subr.mxu0 0.0
    %1038 = vmatpush1.msra.mxu0 %v960
    %1039 = vmatprep.subr.mxu0 0.0
    %1040 = vmatpush1.msra.mxu0 0.0
    %1041 = vmatprep.subr.mxu0 0.0
    %1042 = vmatpush1.msra.mxu0 0.0
    %1043 = vmatprep.subr.mxu0 0.0
    %1044 = vmatpush1.msra.mxu0 0.0
    %1045 = vmatprep.subr.mxu0 0.0
    %1046 = vmatpush1.msra.mxu0 0.0
    %1047 = vmatprep.subr.mxu0 0.0
    %1048 = vmatpush1.msra.mxu0 0.0
    %1049 = vmatprep.subr.mxu0 0.0
    %1050 = vmatpush1.msra.mxu0 0.0
    %1051 = vmatprep.subr.mxu0 0.0
    %1052 = vmatpush1.msra.mxu0 0.0
    %1053 = vmatprep.subr.mxu0 0.0
    %1054 = vmatpush1.msra.mxu0 0.0
    %1055 = vmatprep.subr.mxu0 0.0
    %1056 = vmatpush1.msra.mxu0 0.0
    %1057 = vmatprep.subr.mxu0 0.0
    %1058 = vmatpush1.msra.mxu0 0.0
    %1059 = vmatprep.subr.mxu0 0.0
    %1060 = vmatpush1.msra.mxu0 0.0
    %1061 = vmatprep.subr.mxu0 0.0
    %1062 = vmatpush1.msra.mxu0 0.0
    %1063 = vmatprep.subr.mxu0 0.0
    %1064 = vmatpush1.msra.mxu0 0.0
    %1065 = vmatprep.subr.mxu0 0.0
    %1066 = vmatpush1.msra.mxu0 0.0
    %1067 = vmatprep.subr.mxu0 0.0
    %1068 = vmatpush1.msra.mxu0 0.0
    %1069 = vmatprep.subr.mxu0 0.0
    %1070 = vmatpush1.msra.mxu0 0.0
    %1071 = vmatprep.subr.mxu0 0.0
    %1072 = vmatpush1.msra.mxu0 0.0
    %1073 = vmatprep.subr.mxu0 0.0
    %1074 = vmatpush1.msra.mxu0 0.0
    %1075 = vmatprep.subr.mxu0 0.0
    %1076 = vmatpush1.msra.mxu0 0.0
    %1077 = vmatprep.subr.mxu0 0.0
    %1078 = vmatpush1.msra.mxu0 0.0
    %1079 = vmatprep.subr.mxu0 0.0
    %1080 = vmatpush1.msra.mxu0 0.0
    %1081 = vmatprep.subr.mxu0 0.0
    %1082 = vmatpush1.msra.mxu0 0.0
    %1083 = vmatprep.subr.mxu0 0.0
    %1084 = vmatpush1.msra.mxu0 0.0
    %1085 = vmatprep.subr.mxu0 0.0
    %1086 = vmatpush1.msra.mxu0 0.0
    %1087 = vmatprep.subr.mxu0 0.0
    %1088 = vmatpush1.msra.mxu0 0.0
    %1089 = vmatprep.subr.mxu0 0.0
    %1090 = vmatpush1.msra.mxu0 0.0
    %1091 = vmatprep.subr.mxu0 0.0
    %1092 = vmatpush1.msra.mxu0 0.0
    %1093 = vmatprep.subr.mxu0 0.0
    %1094 = vmatpush1.msra.mxu0 0.0
    %1095 = vmatprep.subr.mxu0 0.0
    %1096 = vmatpush1.msra.mxu0 0.0
    %1097 = vmatprep.subr.mxu0 0.0
    %1098 = vmatpush1.msra.mxu0 0.0
    %1099 = vmatprep.mubr.f32.mxu0 0.0
    %1100 = vmatmul.mubr.f32.gmra.mrb[0].mxu0 %v962
    %v1101 = vpop.f32.mrb[0].mxu0
    %v1102 = vadd.f32 0.0, %v1101
    %v1103 = vpop.f32.mrb[0].mxu0
    %1104 = vdwg.mxu0
    %v1105 = vld [vmem:[%s6] sm:$0xff]
    %v1106 = vld [vmem:[%s6 + $0x8] sm:$0xff]
    %v1107 = vld [vmem:[%s6 + $0x10] sm:$0xff]
    %v1108 = vld [vmem:[%s6 + $0x18] sm:$0xff]
    %v1109 = vld [vmem:[%s6 + $0x20] sm:$0xff]
    %v1110 = vld [vmem:[%s6 + $0x28] sm:$0xff]
    %v1111 = vld [vmem:[%s6 + $0x30] sm:$0xff]
    %v1112 = vld [vmem:[%s6 + $0x38] sm:$0xff]
    %v1113 = vld [vmem:[%s6 + $0x40] sm:$0xff]
    %v1114 = vld [vmem:[%s6 + $0x48] sm:$0xff]
    %v1115 = vld [vmem:[%s6 + $0x50] sm:$0xff]
    %v1116 = vld [vmem:[%s6 + $0x58] sm:$0xff]
    %v1117 = vld [vmem:[%s6 + $0x60] sm:$0xff]
    %v1118 = vld [vmem:[%s6 + $0x68] sm:$0xff]
    %v1119 = vld [vmem:[%s6 + $0x70] sm:$0xff]
    %v1120 = vld [vmem:[%s6 + $0x78] sm:$0xff]
    %v1121 = vld [vmem:[%s6 + $0x80] sm:$0xff]
    %v1122 = vld [vmem:[%s6 + $0x88] sm:$0xff]
    %v1123 = vld [vmem:[%s6 + $0x90] sm:$0xff]
    %v1124 = vld [vmem:[%s6 + $0x98] sm:$0xff]
    %v1125 = vld [vmem:[%s6 + $0xa0] sm:$0xff]
    %v1126 = vld [vmem:[%s6 + $0xa8] sm:$0xff]
    %v1127 = vld [vmem:[%s6 + $0xb0] sm:$0xff]
    %v1128 = vld [vmem:[%s6 + $0xb8] sm:$0xff]
    %v1129 = vld [vmem:[%s6 + $0xc0] sm:$0xff]
    %v1130 = vld [vmem:[%s6 + $0xc8] sm:$0xff]
    %v1131 = vld [vmem:[%s6 + $0xd0] sm:$0xff]
    %v1132 = vld [vmem:[%s6 + $0xd8] sm:$0xff]
    %v1133 = vld [vmem:[%s6 + $0xe0] sm:$0xff]
    %v1134 = vld [vmem:[%s6 + $0xe8] sm:$0xff]
    %v1135 = vld [vmem:[%s6 + $0xf0] sm:$0xff]
    %v1136 = vld [vmem:[%s6 + $0xf8] sm:$0xff]
    %v1137 = vld [vmem:[%s6 + $0x100] sm:$0xff]
    %v1138 = vld [vmem:[%s6 + $0x108] sm:$0xff]
    %v1139 = vld [vmem:[%s6 + $0x110] sm:$0xff]
    %v1140 = vld [vmem:[%s6 + $0x118] sm:$0xff]
    %v1141 = vld [vmem:[%s6 + $0x120] sm:$0xff]
    %v1142 = vld [vmem:[%s6 + $0x128] sm:$0xff]
    %v1143 = vld [vmem:[%s6 + $0x130] sm:$0xff]
    %v1144 = vld [vmem:[%s6 + $0x138] sm:$0xff]
    %v1145 = vld [vmem:[%s6 + $0x140] sm:$0xff]
    %v1146 = vld [vmem:[%s6 + $0x148] sm:$0xff]
    %v1147 = vld [vmem:[%s6 + $0x150] sm:$0xff]
    %v1148 = vld [vmem:[%s6 + $0x158] sm:$0xff]
    %v1149 = vld [vmem:[%s6 + $0x160] sm:$0xff]
    %v1150 = vld [vmem:[%s6 + $0x168] sm:$0xff]
    %v1151 = vld [vmem:[%s6 + $0x170] sm:$0xff]
    %v1152 = vld [vmem:[%s6 + $0x178] sm:$0xff]
    %v1153 = vld [vmem:[%s8] sm:$0x1]
    %v1154 = vlaneseq
    %v1155 = vshrl.u32 %v1154, 7
    %v1156 = vsub.s32 0, %v1155
    %v1157 = vrot.slane %v1153, %v1156
    %1158 = vmatprep.subr.mxu0 0.0
    %1159 = vmatpush1.msra.mxu0 %v1105
    %1160 = vmatprep.subr.mxu0 0.0
    %1161 = vmatpush1.msra.mxu0 %v1106
    %1162 = vmatprep.subr.mxu0 0.0
    %1163 = vmatpush1.msra.mxu0 %v1107
    %1164 = vmatprep.subr.mxu0 0.0
    %1165 = vmatpush1.msra.mxu0 %v1108
    %1166 = vmatprep.subr.mxu0 0.0
    %1167 = vmatpush1.msra.mxu0 %v1109
    %1168 = vmatprep.subr.mxu0 0.0
    %1169 = vmatpush1.msra.mxu0 %v1110
    %1170 = vmatprep.subr.mxu0 0.0
    %1171 = vmatpush1.msra.mxu0 %v1111
    %1172 = vmatprep.subr.mxu0 0.0
    %1173 = vmatpush1.msra.mxu0 %v1112
    %1174 = vmatprep.subr.mxu0 0.0
    %1175 = vmatpush1.msra.mxu0 %v1113
    %1176 = vmatprep.subr.mxu0 0.0
    %1177 = vmatpush1.msra.mxu0 %v1114
    %1178 = vmatprep.subr.mxu0 0.0
    %1179 = vmatpush1.msra.mxu0 %v1115
    %1180 = vmatprep.subr.mxu0 0.0
    %1181 = vmatpush1.msra.mxu0 %v1116
    %1182 = vmatprep.subr.mxu0 0.0
    %1183 = vmatpush1.msra.mxu0 %v1117
    %1184 = vmatprep.subr.mxu0 0.0
    %1185 = vmatpush1.msra.mxu0 %v1118
    %1186 = vmatprep.subr.mxu0 0.0
    %1187 = vmatpush1.msra.mxu0 %v1119
    %1188 = vmatprep.subr.mxu0 0.0
    %1189 = vmatpush1.msra.mxu0 %v1120
    %1190 = vmatprep.subr.mxu0 0.0
    %1191 = vmatpush1.msra.mxu0 %v1121
    %1192 = vmatprep.subr.mxu0 0.0
    %1193 = vmatpush1.msra.mxu0 %v1122
    %1194 = vmatprep.subr.mxu0 0.0
    %1195 = vmatpush1.msra.mxu0 %v1123
    %1196 = vmatprep.subr.mxu0 0.0
    %1197 = vmatpush1.msra.mxu0 %v1124
    %1198 = vmatprep.subr.mxu0 0.0
    %1199 = vmatpush1.msra.mxu0 %v1125
    %1200 = vmatprep.subr.mxu0 0.0
    %1201 = vmatpush1.msra.mxu0 %v1126
    %1202 = vmatprep.subr.mxu0 0.0
    %1203 = vmatpush1.msra.mxu0 %v1127
    %1204 = vmatprep.subr.mxu0 0.0
    %1205 = vmatpush1.msra.mxu0 %v1128
    %1206 = vmatprep.subr.mxu0 0.0
    %1207 = vmatpush1.msra.mxu0 %v1129
    %1208 = vmatprep.subr.mxu0 0.0
    %1209 = vmatpush1.msra.mxu0 %v1130
    %1210 = vmatprep.subr.mxu0 0.0
    %1211 = vmatpush1.msra.mxu0 %v1131
    %1212 = vmatprep.subr.mxu0 0.0
    %1213 = vmatpush1.msra.mxu0 %v1132
    %1214 = vmatprep.subr.mxu0 0.0
    %1215 = vmatpush1.msra.mxu0 %v1133
    %1216 = vmatprep.subr.mxu0 0.0
    %1217 = vmatpush1.msra.mxu0 %v1134
    %1218 = vmatprep.subr.mxu0 0.0
    %1219 = vmatpush1.msra.mxu0 %v1135
    %1220 = vmatprep.subr.mxu0 0.0
    %1221 = vmatpush1.msra.mxu0 %v1136
    %1222 = vmatprep.mubr.f32.mxu0 %v1033
    %1223 = vmatmul.mubr.f32.gmra.mrb[0].mxu0 %v1031
    %v1224 = vpop.f32.mrb[0].mxu0
    %v1225 = vadd.f32 %v1157, %v1224
    %v1226 = vpop.f32.mrb[0].mxu0
    %1227 = vdwg.mxu0
    %1228 = vmatprep.subr.mxu0 0.0
    %1229 = vmatpush1.msra.mxu0 %v1137
    %1230 = vmatprep.subr.mxu0 0.0
    %1231 = vmatpush1.msra.mxu0 %v1138
    %1232 = vmatprep.subr.mxu0 0.0
    %1233 = vmatpush1.msra.mxu0 %v1139
    %1234 = vmatprep.subr.mxu0 0.0
    %1235 = vmatpush1.msra.mxu0 %v1140
    %1236 = vmatprep.subr.mxu0 0.0
    %1237 = vmatpush1.msra.mxu0 %v1141
    %1238 = vmatprep.subr.mxu0 0.0
    %1239 = vmatpush1.msra.mxu0 %v1142
    %1240 = vmatprep.subr.mxu0 0.0
    %1241 = vmatpush1.msra.mxu0 %v1143
    %1242 = vmatprep.subr.mxu0 0.0
    %1243 = vmatpush1.msra.mxu0 %v1144
    %1244 = vmatprep.subr.mxu0 0.0
    %1245 = vmatpush1.msra.mxu0 %v1145
    %1246 = vmatprep.subr.mxu0 0.0
    %1247 = vmatpush1.msra.mxu0 %v1146
    %1248 = vmatprep.subr.mxu0 0.0
    %1249 = vmatpush1.msra.mxu0 %v1147
    %1250 = vmatprep.subr.mxu0 0.0
    %1251 = vmatpush1.msra.mxu0 %v1148
    %1252 = vmatprep.subr.mxu0 0.0
    %1253 = vmatpush1.msra.mxu0 %v1149
    %1254 = vmatprep.subr.mxu0 0.0
    %1255 = vmatpush1.msra.mxu0 %v1150
    %1256 = vmatprep.subr.mxu0 0.0
    %1257 = vmatpush1.msra.mxu0 %v1151
    %1258 = vmatprep.subr.mxu0 0.0
    %1259 = vmatpush1.msra.mxu0 %v1152
    %1260 = vmatprep.subr.mxu0 0.0
    %1261 = vmatpush1.msra.mxu0 0.0
    %1262 = vmatprep.subr.mxu0 0.0
    %1263 = vmatpush1.msra.mxu0 0.0
    %1264 = vmatprep.subr.mxu0 0.0
    %1265 = vmatpush1.msra.mxu0 0.0
    %1266 = vmatprep.subr.mxu0 0.0
    %1267 = vmatpush1.msra.mxu0 0.0
    %1268 = vmatprep.subr.mxu0 0.0
    %1269 = vmatpush1.msra.mxu0 0.0
    %1270 = vmatprep.subr.mxu0 0.0
    %1271 = vmatpush1.msra.mxu0 0.0
    %1272 = vmatprep.subr.mxu0 0.0
    %1273 = vmatpush1.msra.mxu0 0.0
    %1274 = vmatprep.subr.mxu0 0.0
    %1275 = vmatpush1.msra.mxu0 0.0
    %1276 = vmatprep.subr.mxu0 0.0
    %1277 = vmatpush1.msra.mxu0 0.0
    %1278 = vmatprep.subr.mxu0 0.0
    %1279 = vmatpush1.msra.mxu0 0.0
    %1280 = vmatprep.subr.mxu0 0.0
    %1281 = vmatpush1.msra.mxu0 0.0
    %1282 = vmatprep.subr.mxu0 0.0
    %1283 = vmatpush1.msra.mxu0 0.0
    %1284 = vmatprep.subr.mxu0 0.0
    %1285 = vmatpush1.msra.mxu0 0.0
    %1286 = vmatprep.subr.mxu0 0.0
    %1287 = vmatpush1.msra.mxu0 0.0
    %1288 = vmatprep.subr.mxu0 0.0
    %1289 = vmatpush1.msra.mxu0 0.0
    %1290 = vmatprep.subr.mxu0 0.0
    %1291 = vmatpush1.msra.mxu0 0.0
    %1292 = vmatprep.mubr.f32.mxu0 0.0
    %1293 = vmatmul.mubr.f32.gmra.mrb[0].mxu0 %v1102
    %v1294 = vpop.f32.mrb[0].mxu0
    %v1295 = vadd.f32 %v1225, %v1294
    %v1296 = vpop.f32.mrb[0].mxu0
    %1297 = vdwg.mxu0
    %v1298 = vmax.f32 %v1295, 0.0
    %v1299 = vld [vmem:[%s7] sm:$0xff]
    %v1300 = vld [vmem:[%s7 + $0x8] sm:$0xff]
    %v1301 = vld [vmem:[%s7 + $0x10] sm:$0xff]
    %v1302 = vld [vmem:[%s7 + $0x18] sm:$0xff]
    %v1303 = vld [vmem:[%s7 + $0x20] sm:$0xff]
    %v1304 = vld [vmem:[%s7 + $0x28] sm:$0xff]
    %v1305 = vld [vmem:[%s7 + $0x30] sm:$0xff]
    %v1306 = vld [vmem:[%s7 + $0x38] sm:$0xff]
    %v1307 = vld [vmem:[%s7 + $0x40] sm:$0xff]
    %v1308 = vld [vmem:[%s7 + $0x48] sm:$0xff]
    %v1309 = vld [vmem:[%s7 + $0x50] sm:$0xff]
    %v1310 = vld [vmem:[%s7 + $0x58] sm:$0xff]
    %v1311 = vld [vmem:[%s7 + $0x60] sm:$0xff]
    %v1312 = vld [vmem:[%s7 + $0x68] sm:$0xff]
    %v1313 = vld [vmem:[%s7 + $0x70] sm:$0xff]
    %v1314 = vld [vmem:[%s7 + $0x78] sm:$0xff]
    %v1315 = vld [vmem:[%s8 + $0x1] sm:$0x1]
    %v1316 = vlaneseq
    %v1317 = vshrl.u32 %v1316, 7
    %v1318 = vsub.s32 0, %v1317
    %v1319 = vrot.slane %v1315, %v1318
    %1320 = vmatprep.subr.mxu0 0.0
    %1321 = vmatpush1.msra.mxu0 %v1299
    %1322 = vmatprep.subr.mxu0 0.0
    %1323 = vmatpush1.msra.mxu0 %v1300
    %1324 = vmatprep.subr.mxu0 0.0
    %1325 = vmatpush1.msra.mxu0 %v1301
    %1326 = vmatprep.subr.mxu0 0.0
    %1327 = vmatpush1.msra.mxu0 %v1302
    %1328 = vmatprep.subr.mxu0 0.0
    %1329 = vmatpush1.msra.mxu0 %v1303
    %1330 = vmatprep.subr.mxu0 0.0
    %1331 = vmatpush1.msra.mxu0 %v1304
    %1332 = vmatprep.subr.mxu0 0.0
    %1333 = vmatpush1.msra.mxu0 %v1305
    %1334 = vmatprep.subr.mxu0 0.0
    %1335 = vmatpush1.msra.mxu0 %v1306
    %1336 = vmatprep.subr.mxu0 0.0
    %1337 = vmatpush1.msra.mxu0 %v1307
    %1338 = vmatprep.subr.mxu0 0.0
    %1339 = vmatpush1.msra.mxu0 %v1308
    %1340 = vmatprep.subr.mxu0 0.0
    %1341 = vmatpush1.msra.mxu0 %v1309
    %1342 = vmatprep.subr.mxu0 0.0
    %1343 = vmatpush1.msra.mxu0 %v1310
    %1344 = vmatprep.subr.mxu0 0.0
    %1345 = vmatpush1.msra.mxu0 %v1311
    %1346 = vmatprep.subr.mxu0 0.0
    %1347 = vmatpush1.msra.mxu0 %v1312
    %1348 = vmatprep.subr.mxu0 0.0
    %1349 = vmatpush1.msra.mxu0 %v1313
    %1350 = vmatprep.subr.mxu0 0.0
    %1351 = vmatpush1.msra.mxu0 %v1314
    %1352 = vmatprep.subr.mxu0 0.0
    %1353 = vmatpush1.msra.mxu0 0.0
    %1354 = vmatprep.subr.mxu0 0.0
    %1355 = vmatpush1.msra.mxu0 0.0
    %1356 = vmatprep.subr.mxu0 0.0
    %1357 = vmatpush1.msra.mxu0 0.0
    %1358 = vmatprep.subr.mxu0 0.0
    %1359 = vmatpush1.msra.mxu0 0.0
    %1360 = vmatprep.subr.mxu0 0.0
    %1361 = vmatpush1.msra.mxu0 0.0
    %1362 = vmatprep.subr.mxu0 0.0
    %1363 = vmatpush1.msra.mxu0 0.0
    %1364 = vmatprep.subr.mxu0 0.0
    %1365 = vmatpush1.msra.mxu0 0.0
    %1366 = vmatprep.subr.mxu0 0.0
    %1367 = vmatpush1.msra.mxu0 0.0
    %1368 = vmatprep.subr.mxu0 0.0
    %1369 = vmatpush1.msra.mxu0 0.0
    %1370 = vmatprep.subr.mxu0 0.0
    %1371 = vmatpush1.msra.mxu0 0.0
    %1372 = vmatprep.subr.mxu0 0.0
    %1373 = vmatpush1.msra.mxu0 0.0
    %1374 = vmatprep.subr.mxu0 0.0
    %1375 = vmatpush1.msra.mxu0 0.0
    %1376 = vmatprep.subr.mxu0 0.0
    %1377 = vmatpush1.msra.mxu0 0.0
    %1378 = vmatprep.subr.mxu0 0.0
    %1379 = vmatpush1.msra.mxu0 0.0
    %1380 = vmatprep.subr.mxu0 0.0
    %1381 = vmatpush1.msra.mxu0 0.0
    %1382 = vmatprep.subr.mxu0 0.0
    %1383 = vmatpush1.msra.mxu0 0.0
    %1384 = vmatprep.mubr.f32.mxu0 0.0
    %1385 = vmatmul.mubr.f32.gmra.mrb[0].mxu0 %v1298
    %v1386 = vpop.f32.mrb[0].mxu0
    %v1387 = vadd.f32 %v1319, %v1386
    %v1388 = vpop.f32.mrb[0].mxu0
    %1389 = vdwg.mxu0
    %1390 = vst [vmem:[#allocation6] sm:$0x3] %v1387
    // Predicated region
    $region42: #{net_forward.1} parent=1 // pred_check
      _
    $region43: #{net_forward.1} parent=1 // pred_check_branch
      %1392 = sbr.rel (0) target = $region45
    $region44: #{net_forward.1} parent=1 // pred_region
      %s1394 = ssub.s32 32, 32
      %1395 = vsyncadd [#allocation5], %s1394
      %s1397 = sshll.u32 [#allocation6], 4
      %s1398 = int_to_ptr.vmem [resolvable:$true] %s1397
      %1400 = dma.vmem_to_hbm [thread:$0]  %s1398, 32, %s9, [#allocation5]
    $region45: #{net_forward.1} parent=1 // pred_fallthru
      _
    // Predicated region
    $region46: #{net_forward.1} parent=1 // pred_check
      _
    $region47: #{net_forward.1} parent=1 // pred_check_branch
      %1402 = sbr.rel (0) target = $region49
    $region48: #{net_forward.1} parent=1 // pred_region
      %1403 = dma.done [#allocation5], 32
    $region49: #{net_forward.1} parent=1 // pred_fallthru
      _
    %1404 = vsyncpa [#allocation4], 1
    %1405 = vsyncpa [#allocation5], 1

</llo_original>
